<compile_context>
chip_gen: v6e
topology: v6e:2x2x1
jax: 0.10.0
libtpu: 0.0.40
codegen_flags: <defaults>
</compile_context>

<pallas_src>
import jax
import jax.numpy as jnp
from jax import lax
from jax.experimental import pallas as pl
from jax.experimental.pallas import tpu as pltpu


# ----------------------------------------------------------------------------
# Row-tile selection: big tiles (amortize ~0.35us/step pipeline overhead) but
# >= 2 grid steps so v7x megacore can shard the "parallel" axis.
# ----------------------------------------------------------------------------
def _pick_tm(n_rows, max_tm=1024, target_blocks=2):
    tm = min(max_tm, max(1, -(-n_rows // target_blocks)))
    tm = -(-tm // 8) * 8          # multiple of 8 (sublane granularity)
    return max(8, tm)


# ----------------------------------------------------------------------------
# Fused concat -> 3-layer MLP (ReLU) -> LayerNorm [-> + residual] kernel
# ----------------------------------------------------------------------------
def _concat_mlp_layernorm(x_chunks, p, *, residual=False, tm=None, eps=1e-5,
                          compute_dtype=jnp.bfloat16):
    """x_chunks: list of [N, d_c] f32 arrays (the un-materialized concat).
    p: dict with w1 [sum(d_c), H], b1 [1,H], w2 [H,H], b2 [1,H], w3 [H,O], b3 [1,O],
       gamma [1,O], beta [1,O]  (weights stored transposed: [in, out]).
    Returns [N, O] f32 = LayerNorm(MLP(concat(x_chunks))) (+ x_chunks[0] if residual)."""
    N = int(x_chunks[0].shape[0])
    chunk_dims = tuple(int(c.shape[1]) for c in x_chunks)
    num_chunks = len(x_chunks)
    k_total = sum(chunk_dims)
    hidden = int(p["w2"].shape[0])
    out_dim = int(p["w3"].shape[1])
    assert int(p["w1"].shape[0]) == k_total
    if residual:
        assert chunk_dims[0] == out_dim

    if tm is None:
        tm = _pick_tm(N)
    n_blocks = pl.cdiv(N, tm)

    # Weights: cast once at the boundary (tiny), DMA'd once via constant index_maps.
    # x chunks stay f32 in HBM; they are cast to bf16 inside the kernel.
    w1 = p["w1"].astype(compute_dtype)
    w2 = p["w2"].astype(compute_dtype)
    w3 = p["w3"].astype(compute_dtype)

    def kernel(*refs):
        xs_r = refs[:num_chunks]
        w1_r, b1_r, w2_r, b2_r, w3_r, b3_r, g_r, be_r, o_r = refs[num_chunks:]

        # Layer 1: concat built in VMEM (lane-dim concat of 128-wide chunks), single
        # K = sum(d_c) MXU pass; bf16 operands, f32 accumulation.
        x_cat = jnp.concatenate([x[...].astype(compute_dtype) for x in xs_r], axis=-1)
        h = jnp.dot(x_cat, w1_r[...], preferred_element_type=jnp.float32)
        h = jnp.maximum(h + b1_r[...], 0.0)                    # ReLU
        # Layer 2
        h = jnp.dot(h.astype(compute_dtype), w2_r[...], preferred_element_type=jnp.float32)
        h = jnp.maximum(h + b2_r[...], 0.0)                    # ReLU
        # Layer 3 (no nonlinearity)
        y = jnp.dot(h.astype(compute_dtype), w3_r[...], preferred_element_type=jnp.float32)
        y = y + b3_r[...]
        # LayerNorm over the feature (lane) dimension
        mean = jnp.mean(y, axis=-1, keepdims=True)
        yc = y - mean
        var = jnp.mean(yc * yc, axis=-1, keepdims=True)
        y = yc * lax.rsqrt(var + eps) * g_r[...] + be_r[...]
        if residual:
            y = y + xs_r[0][...]                               # f32 skip connection
        o_r[...] = y.astype(o_r.dtype)

    row_spec = lambda i: (i, 0)      # tiled along rows
    const_spec = lambda i: (0, 0)    # resident: DMA'd once (block index never changes)
    # TODO(synk): if hidden/out grow, set pipeline_mode=pl.Buffered(1) on the constant
    #             weight specs to avoid double-buffering them (matters on v7x's 64 MiB VMEM).

    in_specs = (
        [pl.BlockSpec((tm, d), row_spec) for d in chunk_dims]            # x chunks (f32)
        + [pl.BlockSpec((k_total, hidden), const_spec),                  # w1 (bf16)
           pl.BlockSpec((1, hidden), const_spec),                        # b1
           pl.BlockSpec((hidden, hidden), const_spec),                   # w2 (bf16)
           pl.BlockSpec((1, hidden), const_spec),                        # b2
           pl.BlockSpec((hidden, out_dim), const_spec),                  # w3 (bf16)
           pl.BlockSpec((1, out_dim), const_spec),                       # b3
           pl.BlockSpec((1, out_dim), const_spec),                       # gamma
           pl.BlockSpec((1, out_dim), const_spec)]                       # beta
    )

    flops = 2 * N * (k_total * hidden + hidden * hidden + hidden * out_dim)
    bytes_accessed = (
        N * k_total * 4                                                   # f32 x reads
        + (k_total * hidden + hidden * hidden + hidden * out_dim) * 2     # bf16 weights
        + (2 * hidden + 3 * out_dim) * 4                                  # f32 biases/ln
        + N * out_dim * 4                                                 # f32 out
    )

    return pl.pallas_call(
        kernel,
        out_shape=jax.ShapeDtypeStruct((N, out_dim), jnp.float32),
        grid_spec=pltpu.PrefetchScalarGridSpec(
            num_scalar_prefetch=0,
            grid=(n_blocks,),
            in_specs=in_specs,
            out_specs=pl.BlockSpec((tm, out_dim), row_spec),
        ),
        compiler_params=pltpu.CompilerParams(
            dimension_semantics=("parallel",),
            vmem_limit_bytes=48 * 1024 * 1024,
        ),
        cost_estimate=pl.CostEstimate(
            flops=flops, transcendentals=N, bytes_accessed=bytes_accessed),
    )(*x_chunks, w1, p["b1"], w2, p["b2"], w3, p["b3"], p["gamma"], p["beta"])


# ----------------------------------------------------------------------------
# GraphNetBlock forward (edge model then node model), matching the PyTorch spec
# ----------------------------------------------------------------------------
def graphnet_block(node_feature, edge_index, edge_feature, params, *, tm=None):
    """node_feature: [N_node, Dn] f32
       edge_index:   [2, E] int32  (row 0 = sender, row 1 = receiver)
       edge_feature: [E, De] f32
       returns (new_node_feature [N_node, Dn], new_edge_feature [E, De])"""
    send_idx = edge_index[0]
    recv_idx = edge_index[1]

    # EdgeProcessor: LN(MLP([node[sender] || node[receiver] || edge_feature]))
    # TODO(synk): fuse these gathers + the scatter-add below into the kernel via
    #             scalar-prefetched index arrays + manual DMA gather.
    sender_feat = jnp.take(node_feature, send_idx, axis=0)
    receiver_feat = jnp.take(node_feature, recv_idx, axis=0)
    new_edge = _concat_mlp_layernorm(
        [sender_feat, receiver_feat, edge_feature], params["edge"],
        residual=False, tm=tm)

    # NodeProcessor: scatter-add edges to receivers, LN(MLP([node || agg])) + node
    n_node = node_feature.shape[0]
    agg = jnp.zeros((n_node, new_edge.shape[1]), jnp.float32).at[recv_idx].add(new_edge)
    new_node = _concat_mlp_layernorm(
        [node_feature, agg], params["node"],
        residual=True, tm=tm)

    return new_node, new_edge


# ----------------------------------------------------------------------------
# Parameter init (mimics nn.Linear default: uniform +-1/sqrt(fan_in)); W stored [in, out]
# ----------------------------------------------------------------------------
def _init_mlp_ln_params(key, in_dim, hidden_dim, out_dim):
    ks = jax.random.split(key, 6)

    def linear(kw, kb, fan_in, fan_out):
        bound = 1.0 / float(fan_in) ** 0.5
        w = jax.random.uniform(kw, (fan_in, fan_out), jnp.float32, -bound, bound)
        b = jax.random.uniform(kb, (1, fan_out), jnp.float32, -bound, bound)
        return w, b

    w1, b1 = linear(ks[0], ks[1], in_dim, hidden_dim)
    w2, b2 = linear(ks[2], ks[3], hidden_dim, hidden_dim)
    w3, b3 = linear(ks[4], ks[5], hidden_dim, out_dim)
    return {"w1": w1, "b1": b1, "w2": w2, "b2": b2, "w3": w3, "b3": b3,
            "gamma": jnp.ones((1, out_dim), jnp.float32),
            "beta": jnp.zeros((1, out_dim), jnp.float32)}


def init_graphnet_params(key, in_dim_node=128, in_dim_edge=128, hidden_dim=128):
    ke, kn = jax.random.split(key)
    return {
        "edge": _init_mlp_ln_params(ke, 2 * in_dim_node + in_dim_edge, hidden_dim, in_dim_edge),
        "node": _init_mlp_ln_params(kn, in_dim_node + in_dim_edge, hidden_dim, in_dim_node),
    }


# ----------------------------------------------------------------------------
# Pure-JAX f32 reference (mirrors the PyTorch module exactly)
# ----------------------------------------------------------------------------
def _mlp_ln_ref(x, p, eps=1e-5):
    h = jnp.maximum(x @ p["w1"] + p["b1"], 0.0)
    h = jnp.maximum(h @ p["w2"] + p["b2"], 0.0)
    y = h @ p["w3"] + p["b3"]
    mean = y.mean(-1, keepdims=True)
    var = ((y - mean) ** 2).mean(-1, keepdims=True)
    return (y - mean) / jnp.sqrt(var + eps) * p["gamma"] + p["beta"]


def graphnet_block_ref(node_feature, edge_index, edge_feature, params):
    send_idx, recv_idx = edge_index[0], edge_index[1]
    e_in = jnp.concatenate(
        [node_feature[send_idx], node_feature[recv_idx], edge_feature], axis=-1)
    new_edge = _mlp_ln_ref(e_in, params["edge"])
    agg = jnp.zeros((node_feature.shape[0], new_edge.shape[1]),
                    jnp.float32).at[recv_idx].add(new_edge)
    n_in = jnp.concatenate([node_feature, agg], axis=-1)
    new_node = _mlp_ln_ref(n_in, params["node"]) + node_feature
    return new_node, new_edge


if __name__ == "__main__":
    key = jax.random.PRNGKey(0)
    k_node, k_edge, k_send, k_recv, k_param = jax.random.split(key, 5)

    # Small graph, module-default feature dims (128). Edge count deliberately not a
    # multiple of the chosen row tile to exercise the partial-last-block path; node
    # count small enough to exercise the >=2-block (megacore) tm cap.
    n_node, n_edge = 48, 300
    dn = de = hidden = 128

    node_feature = jax.random.normal(k_node, (n_node, dn), jnp.float32)
    edge_feature = jax.random.normal(k_edge, (n_edge, de), jnp.float32)
    senders = jax.random.randint(k_send, (n_edge,), 0, n_node, jnp.int32)
    receivers = jax.random.randint(k_recv, (n_edge,), 0, n_node, jnp.int32)
    edge_index = jnp.stack([senders, receivers], axis=0)

    params = init_graphnet_params(k_param, dn, de, hidden)

    new_node, new_edge = graphnet_block(node_feature, edge_index, edge_feature, params)
    new_node = jax.block_until_ready(new_node)
    new_edge = jax.block_until_ready(new_edge)

    ref_node, ref_edge = graphnet_block_ref(node_feature, edge_index, edge_feature, params)

    assert new_node.shape == (n_node, dn)
    assert new_edge.shape == (n_edge, de)
    assert bool(jnp.all(jnp.isfinite(new_node))) and bool(jnp.all(jnp.isfinite(new_edge)))
    # bf16 matmul operands with f32 accumulation (K <= 384) vs pure-f32 reference.
    assert jnp.allclose(new_edge, ref_edge, atol=3e-2, rtol=2e-2)
    assert jnp.allclose(new_node, ref_node, atol=3e-2, rtol=2e-2)

    print("KERNEL_OK")
</pallas_src>

<mosaic_0001>
module attributes {stable_mosaic.version = 11 : i64} {
  func.func @kernel(%arg0: i32, %arg1: memref<152x128xf32, #tpu.memory_space<vmem>>, %arg2: memref<152x128xf32, #tpu.memory_space<vmem>>, %arg3: memref<152x128xf32, #tpu.memory_space<vmem>>, %arg4: memref<384x128xbf16, #tpu.memory_space<vmem>>, %arg5: memref<1x128xf32, #tpu.memory_space<vmem>>, %arg6: memref<128x128xbf16, #tpu.memory_space<vmem>>, %arg7: memref<1x128xf32, #tpu.memory_space<vmem>>, %arg8: memref<128x128xbf16, #tpu.memory_space<vmem>>, %arg9: memref<1x128xf32, #tpu.memory_space<vmem>>, %arg10: memref<1x128xf32, #tpu.memory_space<vmem>>, %arg11: memref<1x128xf32, #tpu.memory_space<vmem>>, %arg12: memref<152x128xf32, #tpu.memory_space<vmem>>) attributes {dimension_semantics = [#tpu.dimension_semantics<parallel>], iteration_bounds = array<i64: 2>, scalar_prefetch = 0 : i64, scratch_operands = 0 : i64, tpu.core_type = #tpu.core_type<tc>, window_params = [{transform_indices = @transform_0, window_bounds = array<i64: 152, 128>}, {transform_indices = @transform_1, window_bounds = array<i64: 152, 128>}, {transform_indices = @transform_2, window_bounds = array<i64: 152, 128>}, {pipeline_mode = #tpu.pipeline_mode<synchronous>, transform_indices = @transform_3, window_bounds = array<i64: 384, 128>}, {pipeline_mode = #tpu.pipeline_mode<synchronous>, transform_indices = @transform_4, window_bounds = array<i64: 1, 128>}, {pipeline_mode = #tpu.pipeline_mode<synchronous>, transform_indices = @transform_5, window_bounds = array<i64: 128, 128>}, {pipeline_mode = #tpu.pipeline_mode<synchronous>, transform_indices = @transform_6, window_bounds = array<i64: 1, 128>}, {pipeline_mode = #tpu.pipeline_mode<synchronous>, transform_indices = @transform_7, window_bounds = array<i64: 128, 128>}, {pipeline_mode = #tpu.pipeline_mode<synchronous>, transform_indices = @transform_8, window_bounds = array<i64: 1, 128>}, {pipeline_mode = #tpu.pipeline_mode<synchronous>, transform_indices = @transform_9, window_bounds = array<i64: 1, 128>}, {pipeline_mode = #tpu.pipeline_mode<synchronous>, transform_indices = @transform_10, window_bounds = array<i64: 1, 128>}, {transform_indices = @transform_11, window_bounds = array<i64: 152, 128>}]} {
    %c0 = arith.constant 0 : index
    %c0_0 = arith.constant 0 : index
    %0 = vector.load %arg1[%c0, %c0_0] : memref<152x128xf32, #tpu.memory_space<vmem>>, vector<152x128xf32>
    %1 = arith.truncf %0 : vector<152x128xf32> to vector<152x128xbf16>
    %c0_1 = arith.constant 0 : index
    %c0_2 = arith.constant 0 : index
    %2 = vector.load %arg2[%c0_1, %c0_2] : memref<152x128xf32, #tpu.memory_space<vmem>>, vector<152x128xf32>
    %3 = arith.truncf %2 : vector<152x128xf32> to vector<152x128xbf16>
    %c0_3 = arith.constant 0 : index
    %c0_4 = arith.constant 0 : index
    %4 = vector.load %arg3[%c0_3, %c0_4] : memref<152x128xf32, #tpu.memory_space<vmem>>, vector<152x128xf32>
    %5 = arith.truncf %4 : vector<152x128xf32> to vector<152x128xbf16>
    %6 = tpu.concatenate %1, %3, %5 in 1 : vector<152x128xbf16>, vector<152x128xbf16>, vector<152x128xbf16> -> vector<152x384xbf16>
    %c0_5 = arith.constant 0 : index
    %c0_6 = arith.constant 0 : index
    %7 = vector.load %arg4[%c0_5, %c0_6] : memref<384x128xbf16, #tpu.memory_space<vmem>>, vector<384x128xbf16>
    %cst = arith.constant dense<0.000000e+00> : vector<152x128xf32>
    %8 = tpu.matmul %6, %7, %cst {dimension_numbers = #tpu.dot_dimension_numbers<[1], [0], [0], [1], [0, 0, 1, 1], [], []>} : vector<152x384xbf16>, vector<384x128xbf16>, vector<152x128xf32> -> vector<152x128xf32>
    %c0_7 = arith.constant 0 : index
    %c0_8 = arith.constant 0 : index
    %9 = vector.load %arg5[%c0_7, %c0_8] : memref<1x128xf32, #tpu.memory_space<vmem>>, vector<1x128xf32>
    %10 = vector.broadcast %9 : vector<1x128xf32> to vector<152x128xf32>
    %11 = arith.addf %8, %10 : vector<152x128xf32>
    %cst_9 = arith.constant 0.000000e+00 : f32
    %12 = vector.broadcast %cst_9 : f32 to vector<152x128xf32>
    %13 = arith.maximumf %11, %12 : vector<152x128xf32>
    %14 = arith.truncf %13 : vector<152x128xf32> to vector<152x128xbf16>
    %c0_10 = arith.constant 0 : index
    %c0_11 = arith.constant 0 : index
    %15 = vector.load %arg6[%c0_10, %c0_11] : memref<128x128xbf16, #tpu.memory_space<vmem>>, vector<128x128xbf16>
    %cst_12 = arith.constant dense<0.000000e+00> : vector<152x128xf32>
    %16 = tpu.matmul %14, %15, %cst_12 {dimension_numbers = #tpu.dot_dimension_numbers<[1], [0], [0], [1], [0, 0, 1, 1], [], []>} : vector<152x128xbf16>, vector<128x128xbf16>, vector<152x128xf32> -> vector<152x128xf32>
    %c0_13 = arith.constant 0 : index
    %c0_14 = arith.constant 0 : index
    %17 = vector.load %arg7[%c0_13, %c0_14] : memref<1x128xf32, #tpu.memory_space<vmem>>, vector<1x128xf32>
    %18 = vector.broadcast %17 : vector<1x128xf32> to vector<152x128xf32>
    %19 = arith.addf %16, %18 : vector<152x128xf32>
    %cst_15 = arith.constant 0.000000e+00 : f32
    %20 = vector.broadcast %cst_15 : f32 to vector<152x128xf32>
    %21 = arith.maximumf %19, %20 : vector<152x128xf32>
    %22 = arith.truncf %21 : vector<152x128xf32> to vector<152x128xbf16>
    %c0_16 = arith.constant 0 : index
    %c0_17 = arith.constant 0 : index
    %23 = vector.load %arg8[%c0_16, %c0_17] : memref<128x128xbf16, #tpu.memory_space<vmem>>, vector<128x128xbf16>
    %cst_18 = arith.constant dense<0.000000e+00> : vector<152x128xf32>
    %24 = tpu.matmul %22, %23, %cst_18 {dimension_numbers = #tpu.dot_dimension_numbers<[1], [0], [0], [1], [0, 0, 1, 1], [], []>} : vector<152x128xbf16>, vector<128x128xbf16>, vector<152x128xf32> -> vector<152x128xf32>
    %c0_19 = arith.constant 0 : index
    %c0_20 = arith.constant 0 : index
    %25 = vector.load %arg9[%c0_19, %c0_20] : memref<1x128xf32, #tpu.memory_space<vmem>>, vector<1x128xf32>
    %26 = vector.broadcast %25 : vector<1x128xf32> to vector<152x128xf32>
    %27 = arith.addf %24, %26 : vector<152x128xf32>
    %cst_21 = arith.constant dense<0.000000e+00> : vector<152xf32>
    %28 = vector.multi_reduction <add>, %27, %cst_21 [1] : vector<152x128xf32> to vector<152xf32>
    %29 = vector.shape_cast %28 : vector<152xf32> to vector<152x1xf32>
    %cst_22 = arith.constant 1.280000e+02 : f32
    %30 = vector.broadcast %cst_22 : f32 to vector<152x1xf32>
    %31 = arith.divf %29, %30 : vector<152x1xf32>
    %32 = vector.broadcast %31 : vector<152x1xf32> to vector<152x128xf32>
    %33 = arith.subf %27, %32 : vector<152x128xf32>
    %34 = arith.mulf %33, %33 : vector<152x128xf32>
    %cst_23 = arith.constant dense<0.000000e+00> : vector<152xf32>
    %35 = vector.multi_reduction <add>, %34, %cst_23 [1] : vector<152x128xf32> to vector<152xf32>
    %36 = vector.shape_cast %35 : vector<152xf32> to vector<152x1xf32>
    %cst_24 = arith.constant 1.280000e+02 : f32
    %37 = vector.broadcast %cst_24 : f32 to vector<152x1xf32>
    %38 = arith.divf %36, %37 : vector<152x1xf32>
    %cst_25 = arith.constant 9.99999974E-6 : f32
    %39 = vector.broadcast %cst_25 : f32 to vector<152x1xf32>
    %40 = arith.addf %38, %39 : vector<152x1xf32>
    %41 = math.rsqrt %40 : vector<152x1xf32>
    %42 = vector.broadcast %41 : vector<152x1xf32> to vector<152x128xf32>
    %43 = arith.mulf %33, %42 : vector<152x128xf32>
    %c0_26 = arith.constant 0 : index
    %c0_27 = arith.constant 0 : index
    %44 = vector.load %arg10[%c0_26, %c0_27] : memref<1x128xf32, #tpu.memory_space<vmem>>, vector<1x128xf32>
    %45 = vector.broadcast %44 : vector<1x128xf32> to vector<152x128xf32>
    %46 = arith.mulf %43, %45 : vector<152x128xf32>
    %c0_28 = arith.constant 0 : index
    %c0_29 = arith.constant 0 : index
    %47 = vector.load %arg11[%c0_28, %c0_29] : memref<1x128xf32, #tpu.memory_space<vmem>>, vector<1x128xf32>
    %48 = vector.broadcast %47 : vector<1x128xf32> to vector<152x128xf32>
    %49 = arith.addf %46, %48 : vector<152x128xf32>
    %c0_30 = arith.constant 0 : index
    %c0_31 = arith.constant 0 : index
    %50 = vector.load %arg12[%c0_30, %c0_31] : memref<152x128xf32, #tpu.memory_space<vmem>>, vector<152x128xf32>
    tpu.vector_store %arg12[%c0_30, %c0_31], %49 {strides = array<i32>} : memref<152x128xf32, #tpu.memory_space<vmem>>, vector<152x128xf32>,
    return
  }
  func.func @transform_0(%arg0: i32) -> (i32, i32) {
    %c0_i32 = arith.constant 0 : i32
    %c0_i32_0 = arith.constant 0 : i32
    return %arg0, %c0_i32 : i32, i32
  }
  func.func @transform_1(%arg0: i32) -> (i32, i32) {
    %c0_i32 = arith.constant 0 : i32
    %c0_i32_0 = arith.constant 0 : i32
    return %arg0, %c0_i32 : i32, i32
  }
  func.func @transform_2(%arg0: i32) -> (i32, i32) {
    %c0_i32 = arith.constant 0 : i32
    %c0_i32_0 = arith.constant 0 : i32
    return %arg0, %c0_i32 : i32, i32
  }
  func.func @transform_3(%arg0: i32) -> (i32, i32) {
    %c0_i32 = arith.constant 0 : i32
    %c0_i32_0 = arith.constant 0 : i32
    %c0_i32_1 = arith.constant 0 : i32
    return %c0_i32, %c0_i32_0 : i32, i32
  }
  func.func @transform_4(%arg0: i32) -> (i32, i32) {
    %c0_i32 = arith.constant 0 : i32
    %c0_i32_0 = arith.constant 0 : i32
    %c0_i32_1 = arith.constant 0 : i32
    return %c0_i32, %c0_i32_0 : i32, i32
  }
  func.func @transform_5(%arg0: i32) -> (i32, i32) {
    %c0_i32 = arith.constant 0 : i32
    %c0_i32_0 = arith.constant 0 : i32
    %c0_i32_1 = arith.constant 0 : i32
    return %c0_i32, %c0_i32_0 : i32, i32
  }
  func.func @transform_6(%arg0: i32) -> (i32, i32) {
    %c0_i32 = arith.constant 0 : i32
    %c0_i32_0 = arith.constant 0 : i32
    %c0_i32_1 = arith.constant 0 : i32
    return %c0_i32, %c0_i32_0 : i32, i32
  }
  func.func @transform_7(%arg0: i32) -> (i32, i32) {
    %c0_i32 = arith.constant 0 : i32
    %c0_i32_0 = arith.constant 0 : i32
    %c0_i32_1 = arith.constant 0 : i32
    return %c0_i32, %c0_i32_0 : i32, i32
  }
  func.func @transform_8(%arg0: i32) -> (i32, i32) {
    %c0_i32 = arith.constant 0 : i32
    %c0_i32_0 = arith.constant 0 : i32
    %c0_i32_1 = arith.constant 0 : i32
    return %c0_i32, %c0_i32_0 : i32, i32
  }
  func.func @transform_9(%arg0: i32) -> (i32, i32) {
    %c0_i32 = arith.constant 0 : i32
    %c0_i32_0 = arith.constant 0 : i32
    %c0_i32_1 = arith.constant 0 : i32
    return %c0_i32, %c0_i32_0 : i32, i32
  }
  func.func @transform_10(%arg0: i32) -> (i32, i32) {
    %c0_i32 = arith.constant 0 : i32
    %c0_i32_0 = arith.constant 0 : i32
    %c0_i32_1 = arith.constant 0 : i32
    return %c0_i32, %c0_i32_0 : i32, i32
  }
  func.func @transform_11(%arg0: i32) -> (i32, i32) {
    %c0_i32 = arith.constant 0 : i32
    %c0_i32_0 = arith.constant 0 : i32
    return %arg0, %c0_i32 : i32, i32
  }
}

</mosaic_0001>

<llo_original>
// kernel: tpu_custom_call.1
$region0: #{tpu_custom_call.1}
  #allocation0 [shape = 'u32[]', space=smem, size = 0x4, offset = 0x4, fixed_abs, tag = 'smem constant byte address 0x4 - core index']
  #allocation1 [shape = 'u32[144,128]{1,0:T(1,128)}', space=vmem, size = 0x12000, scoped, tag = 'internal scratch']
  %s0 = inlined_call_operand.hbm [shape: f32[300,128], index: 0, kind: input, shape index: {}]
  %s1 = inlined_call_operand.hbm [shape: f32[300,128], index: 1, kind: input, shape index: {}]
  %s2 = inlined_call_operand.hbm [shape: f32[300,128], index: 2, kind: input, shape index: {}]
  %s3 = inlined_call_operand.hbm [shape: bf16[384,128], index: 3, kind: input, shape index: {}]
  %s4 = inlined_call_operand.vmem [shape: f32[1,128], index: 4, kind: input, shape index: {}]
  %s5 = inlined_call_operand.hbm [shape: bf16[128,128], index: 5, kind: input, shape index: {}]
  %s6 = inlined_call_operand.vmem [shape: f32[1,128], index: 6, kind: input, shape index: {}]
  %s7 = inlined_call_operand.hbm [shape: bf16[128,128], index: 7, kind: input, shape index: {}]
  %s8 = inlined_call_operand.vmem [shape: f32[1,128], index: 8, kind: input, shape index: {}]
  %s9 = inlined_call_operand.vmem [shape: f32[1,128], index: 9, kind: input, shape index: {}]
  %s10 = inlined_call_operand.vmem [shape: f32[1,128], index: 10, kind: input, shape index: {}]
  %s11 = inlined_call_operand.hbm [shape: f32[300,128], index: 11, kind: output, shape index: {}]
  %s12 = sld [smem:[#allocation0]]
  $region101: #{tpu_custom_call.1} parent=0
    _
  %s14 = ssub.s32 1, %s12
  %s15 = scalar_select 0, %s14, %s12
  $region1: #{tpu_custom_call.1} parent=0
    #allocation2 [shape = 'u8[155648]{0}', space=vmem, size = 0x26000, scoped, tag = 'input window, operand 0']
    #allocation3 [shape = 's32[2]{0}', space=sflag, size = 0x8, scoped, tag = 'scoped memory for tpu_custom_call.1']
    #allocation4 [shape = 's32[2]{0}', space=sflag, size = 0x8, scoped, tag = 'scoped memory for tpu_custom_call.1']
    #allocation5 [shape = 'u8[155648]{0}', space=vmem, size = 0x26000, scoped, tag = 'input window, operand 1']
    #allocation6 [shape = 's32[2]{0}', space=sflag, size = 0x8, scoped, tag = 'scoped memory for tpu_custom_call.1']
    #allocation7 [shape = 'u8[155648]{0}', space=vmem, size = 0x26000, scoped, tag = 'input window, operand 2']
    #allocation8 [shape = 'u8[98304]{0}', space=vmem, size = 0x18000, scoped, tag = 'input window, operand 3, single buffered']
    #allocation9 [shape = 's32[1]{0}', space=sflag, size = 0x4, scoped, tag = 'scoped memory for tpu_custom_call.1']
    #allocation10 [shape = 'u8[32768]{0}', space=vmem, size = 0x8000, scoped, tag = 'input window, operand 5, single buffered']
    #allocation11 [shape = 'u8[32768]{0}', space=vmem, size = 0x8000, scoped, tag = 'input window, operand 7, single buffered']
    #allocation12 [shape = 's32[1]{0}', space=sflag, size = 0x4, scoped, tag = 'scoped memory for tpu_custom_call.1']
    #allocation13 [shape = 'u8[155648]{0}', space=vmem, size = 0x26000, scoped, tag = 'output window, operand 0']
    %16 = vsyncpa [#allocation3], 0
    %s17 = scalar_lea.sflag [#allocation3], 1
    %18 = vsyncpa %s17, 0
    %19 = vsyncpa [#allocation6], 0
    %s20 = scalar_lea.sflag [#allocation6], 1
    %21 = vsyncpa %s20, 0
    %22 = vsyncpa [#allocation9], 0
    %23 = vsyncpa [#allocation12], 0
    %24 = vsyncpa [#allocation4], 0
    %s25 = scalar_lea.sflag [#allocation4], 1
    %26 = vsyncpa %s25, 0
    loop: start=0, step=1, limit=4
    $region2: #{tpu_custom_call.1} parent=1 // loop_pre_header
      _
    $region3: #{tpu_custom_call.1} parent=1 // loop_header
      %s28 = sphi 0, %s32
      %p29 = scmp.ge.s32.totalorder %s28, 4
      %s38 = sphi 0, %s40
      %s41 = sphi 0, %s38
      %s42 = sphi 0, %s41
      %s58 = sphi 0, %s42
      %s64 = sphi 0, %s66
      %s67 = sphi 0, %s64
      %s68 = sphi 0, %s67
      %s84 = sphi 0, %s68
      %s90 = sphi 0, %s92
      %s93 = sphi 0, %s90
      %s94 = sphi 0, %s93
      %s110 = sphi 0, %s94
      %s114 = sphi 0, %s114
      %s116 = sphi 0, %s114
      %s117 = sphi 0, %s116
      %s131 = sphi 0, %s117
      %s135 = sphi 0, %s135
      %s137 = sphi 0, %s135
      %s138 = sphi 0, %s137
      %s152 = sphi 0, %s138
      %s156 = sphi 0, %s156
      %s158 = sphi 0, %s156
      %s159 = sphi 0, %s158
      %s173 = sphi 0, %s159
      %s177 = sphi 0, %s177
      %s179 = sphi 0, %s177
      %s180 = sphi 0, %s179
      %s194 = sphi 0, %s180
      %s198 = sphi 0, %s198
      %s200 = sphi 0, %s198
      %s201 = sphi 0, %s200
      %s215 = sphi 0, %s201
      %s219 = sphi 0, %s219
      %s221 = sphi 0, %s219
      %s222 = sphi 0, %s221
      %s236 = sphi 0, %s222
      %s240 = sphi 0, %s240
      %s242 = sphi 0, %s240
      %s243 = sphi 0, %s242
      %s257 = sphi 0, %s243
      %s261 = sphi 0, %s261
      %s263 = sphi 0, %s261
      %s264 = sphi 0, %s263
      %s278 = sphi 0, %s264
      %s284 = sphi 0, %s286
      %s287 = sphi 0, %s284
      %s288 = sphi 0, %s287
      %s304 = sphi 0, %s288
    $region4: #{tpu_custom_call.1} parent=1 // loop_header_branch
      %31 = sbr.rel (%p29) target = $region8
    $region5: #{tpu_custom_call.1} parent=1 // loop_body
      %s33 = ssub.s32 %s28, 1
      %s34 = ssub.s32 %s28, 2
      %s35 = sadd.s32 %s28, 1
      %s36 = ssub.s32 %s28, %s35
      %p37 = scmp.eq.s32.totalorder %s36, 0
      %s39 = sadd.s32 %s38, 1
      %s40 = scalar_select %p37, %s38, %s39
      %p43 = pneg %p37
      %p44 = scmp.eq.s32.totalorder %s28, 1
      %p45 = por %p43, %p44
      %p46 = scmp.ne.s32.totalorder %s38, %s41
      %p47 = scmp.eq.s32.totalorder %s28, 0
      %p48 = por %p46, %p47
      %p49 = scmp.ne.s32.totalorder %s38, %s41
      %p50 = scmp.eq.s32.totalorder %s33, 1
      %p51 = por %p49, %p50
      %p52 = scmp.ne.s32.totalorder %s41, %s42
      %p53 = scmp.eq.s32.totalorder %s33, 0
      %p54 = por %p52, %p53
      %p55 = scmp.ne.s32.totalorder %s41, %s42
      %p56 = scmp.eq.s32.totalorder %s34, 1
      %p57 = por %p55, %p56
      %p59 = scmp.ne.s32.totalorder %s42, %s58
      %p60 = scmp.eq.s32.totalorder %s34, 0
      %p61 = por %p59, %p60
      %s62 = ssub.s32 %s28, %s35
      %p63 = scmp.eq.s32.totalorder %s62, 0
      %s65 = sadd.s32 %s64, 1
      %s66 = scalar_select %p63, %s64, %s65
      %p69 = pneg %p63
      %p70 = scmp.eq.s32.totalorder %s28, 1
      %p71 = por %p69, %p70
      %p72 = scmp.ne.s32.totalorder %s64, %s67
      %p73 = scmp.eq.s32.totalorder %s28, 0
      %p74 = por %p72, %p73
      %p75 = scmp.ne.s32.totalorder %s64, %s67
      %p76 = scmp.eq.s32.totalorder %s33, 1
      %p77 = por %p75, %p76
      %p78 = scmp.ne.s32.totalorder %s67, %s68
      %p79 = scmp.eq.s32.totalorder %s33, 0
      %p80 = por %p78, %p79
      %p81 = scmp.ne.s32.totalorder %s67, %s68
      %p82 = scmp.eq.s32.totalorder %s34, 1
      %p83 = por %p81, %p82
      %p85 = scmp.ne.s32.totalorder %s68, %s84
      %p86 = scmp.eq.s32.totalorder %s34, 0
      %p87 = por %p85, %p86
      %s88 = ssub.s32 %s28, %s35
      %p89 = scmp.eq.s32.totalorder %s88, 0
      %s91 = sadd.s32 %s90, 1
      %s92 = scalar_select %p89, %s90, %s91
      %p95 = pneg %p89
      %p96 = scmp.eq.s32.totalorder %s28, 1
      %p97 = por %p95, %p96
      %p98 = scmp.ne.s32.totalorder %s90, %s93
      %p99 = scmp.eq.s32.totalorder %s28, 0
      %p100 = por %p98, %p99
      %p101 = scmp.ne.s32.totalorder %s90, %s93
      %p102 = scmp.eq.s32.totalorder %s33, 1
      %p103 = por %p101, %p102
      %p104 = scmp.ne.s32.totalorder %s93, %s94
      %p105 = scmp.eq.s32.totalorder %s33, 0
      %p106 = por %p104, %p105
      %p107 = scmp.ne.s32.totalorder %s93, %s94
      %p108 = scmp.eq.s32.totalorder %s34, 1
      %p109 = por %p107, %p108
      %p111 = scmp.ne.s32.totalorder %s94, %s110
      %p112 = scmp.eq.s32.totalorder %s34, 0
      %p113 = por %p111, %p112
      %s115 = sadd.s32 %s114, 1
      %p118 = scmp.eq.s32.totalorder %s28, 1
      %p119 = scmp.ne.s32.totalorder %s114, %s116
      %p120 = scmp.eq.s32.totalorder %s28, 0
      %p121 = por %p119, %p120
      %p122 = scmp.ne.s32.totalorder %s114, %s116
      %p123 = scmp.eq.s32.totalorder %s33, 1
      %p124 = por %p122, %p123
      %p125 = scmp.ne.s32.totalorder %s116, %s117
      %p126 = scmp.eq.s32.totalorder %s33, 0
      %p127 = por %p125, %p126
      %p128 = scmp.ne.s32.totalorder %s116, %s117
      %p129 = scmp.eq.s32.totalorder %s34, 1
      %p130 = por %p128, %p129
      %p132 = scmp.ne.s32.totalorder %s117, %s131
      %p133 = scmp.eq.s32.totalorder %s34, 0
      %p134 = por %p132, %p133
      %s136 = sadd.s32 %s135, 1
      %p139 = scmp.eq.s32.totalorder %s28, 1
      %p140 = scmp.ne.s32.totalorder %s135, %s137
      %p141 = scmp.eq.s32.totalorder %s28, 0
      %p142 = por %p140, %p141
      %p143 = scmp.ne.s32.totalorder %s135, %s137
      %p144 = scmp.eq.s32.totalorder %s33, 1
      %p145 = por %p143, %p144
      %p146 = scmp.ne.s32.totalorder %s137, %s138
      %p147 = scmp.eq.s32.totalorder %s33, 0
      %p148 = por %p146, %p147
      %p149 = scmp.ne.s32.totalorder %s137, %s138
      %p150 = scmp.eq.s32.totalorder %s34, 1
      %p151 = por %p149, %p150
      %p153 = scmp.ne.s32.totalorder %s138, %s152
      %p154 = scmp.eq.s32.totalorder %s34, 0
      %p155 = por %p153, %p154
      %s157 = sadd.s32 %s156, 1
      %p160 = scmp.eq.s32.totalorder %s28, 1
      %p161 = scmp.ne.s32.totalorder %s156, %s158
      %p162 = scmp.eq.s32.totalorder %s28, 0
      %p163 = por %p161, %p162
      %p164 = scmp.ne.s32.totalorder %s156, %s158
      %p165 = scmp.eq.s32.totalorder %s33, 1
      %p166 = por %p164, %p165
      %p167 = scmp.ne.s32.totalorder %s158, %s159
      %p168 = scmp.eq.s32.totalorder %s33, 0
      %p169 = por %p167, %p168
      %p170 = scmp.ne.s32.totalorder %s158, %s159
      %p171 = scmp.eq.s32.totalorder %s34, 1
      %p172 = por %p170, %p171
      %p174 = scmp.ne.s32.totalorder %s159, %s173
      %p175 = scmp.eq.s32.totalorder %s34, 0
      %p176 = por %p174, %p175
      %s178 = sadd.s32 %s177, 1
      %p181 = scmp.eq.s32.totalorder %s28, 1
      %p182 = scmp.ne.s32.totalorder %s177, %s179
      %p183 = scmp.eq.s32.totalorder %s28, 0
      %p184 = por %p182, %p183
      %p185 = scmp.ne.s32.totalorder %s177, %s179
      %p186 = scmp.eq.s32.totalorder %s33, 1
      %p187 = por %p185, %p186
      %p188 = scmp.ne.s32.totalorder %s179, %s180
      %p189 = scmp.eq.s32.totalorder %s33, 0
      %p190 = por %p188, %p189
      %p191 = scmp.ne.s32.totalorder %s179, %s180
      %p192 = scmp.eq.s32.totalorder %s34, 1
      %p193 = por %p191, %p192
      %p195 = scmp.ne.s32.totalorder %s180, %s194
      %p196 = scmp.eq.s32.totalorder %s34, 0
      %p197 = por %p195, %p196
      %s199 = sadd.s32 %s198, 1
      %p202 = scmp.eq.s32.totalorder %s28, 1
      %p203 = scmp.ne.s32.totalorder %s198, %s200
      %p204 = scmp.eq.s32.totalorder %s28, 0
      %p205 = por %p203, %p204
      %p206 = scmp.ne.s32.totalorder %s198, %s200
      %p207 = scmp.eq.s32.totalorder %s33, 1
      %p208 = por %p206, %p207
      %p209 = scmp.ne.s32.totalorder %s200, %s201
      %p210 = scmp.eq.s32.totalorder %s33, 0
      %p211 = por %p209, %p210
      %p212 = scmp.ne.s32.totalorder %s200, %s201
      %p213 = scmp.eq.s32.totalorder %s34, 1
      %p214 = por %p212, %p213
      %p216 = scmp.ne.s32.totalorder %s201, %s215
      %p217 = scmp.eq.s32.totalorder %s34, 0
      %p218 = por %p216, %p217
      %s220 = sadd.s32 %s219, 1
      %p223 = scmp.eq.s32.totalorder %s28, 1
      %p224 = scmp.ne.s32.totalorder %s219, %s221
      %p225 = scmp.eq.s32.totalorder %s28, 0
      %p226 = por %p224, %p225
      %p227 = scmp.ne.s32.totalorder %s219, %s221
      %p228 = scmp.eq.s32.totalorder %s33, 1
      %p229 = por %p227, %p228
      %p230 = scmp.ne.s32.totalorder %s221, %s222
      %p231 = scmp.eq.s32.totalorder %s33, 0
      %p232 = por %p230, %p231
      %p233 = scmp.ne.s32.totalorder %s221, %s222
      %p234 = scmp.eq.s32.totalorder %s34, 1
      %p235 = por %p233, %p234
      %p237 = scmp.ne.s32.totalorder %s222, %s236
      %p238 = scmp.eq.s32.totalorder %s34, 0
      %p239 = por %p237, %p238
      %s241 = sadd.s32 %s240, 1
      %p244 = scmp.eq.s32.totalorder %s28, 1
      %p245 = scmp.ne.s32.totalorder %s240, %s242
      %p246 = scmp.eq.s32.totalorder %s28, 0
      %p247 = por %p245, %p246
      %p248 = scmp.ne.s32.totalorder %s240, %s242
      %p249 = scmp.eq.s32.totalorder %s33, 1
      %p250 = por %p248, %p249
      %p251 = scmp.ne.s32.totalorder %s242, %s243
      %p252 = scmp.eq.s32.totalorder %s33, 0
      %p253 = por %p251, %p252
      %p254 = scmp.ne.s32.totalorder %s242, %s243
      %p255 = scmp.eq.s32.totalorder %s34, 1
      %p256 = por %p254, %p255
      %p258 = scmp.ne.s32.totalorder %s243, %s257
      %p259 = scmp.eq.s32.totalorder %s34, 0
      %p260 = por %p258, %p259
      %s262 = sadd.s32 %s261, 1
      %p265 = scmp.eq.s32.totalorder %s28, 1
      %p266 = scmp.ne.s32.totalorder %s261, %s263
      %p267 = scmp.eq.s32.totalorder %s28, 0
      %p268 = por %p266, %p267
      %p269 = scmp.ne.s32.totalorder %s261, %s263
      %p270 = scmp.eq.s32.totalorder %s33, 1
      %p271 = por %p269, %p270
      %p272 = scmp.ne.s32.totalorder %s263, %s264
      %p273 = scmp.eq.s32.totalorder %s33, 0
      %p274 = por %p272, %p273
      %p275 = scmp.ne.s32.totalorder %s263, %s264
      %p276 = scmp.eq.s32.totalorder %s34, 1
      %p277 = por %p275, %p276
      %p279 = scmp.ne.s32.totalorder %s264, %s278
      %p280 = scmp.eq.s32.totalorder %s34, 0
      %p281 = por %p279, %p280
      %s282 = ssub.s32 %s28, %s35
      %p283 = scmp.eq.s32.totalorder %s282, 0
      %s285 = sadd.s32 %s284, 1
      %s286 = scalar_select %p283, %s284, %s285
      %p289 = pneg %p283
      %p290 = scmp.eq.s32.totalorder %s28, 1
      %p291 = por %p289, %p290
      %p292 = scmp.ne.s32.totalorder %s284, %s287
      %p293 = scmp.eq.s32.totalorder %s28, 0
      %p294 = por %p292, %p293
      %p295 = scmp.ne.s32.totalorder %s284, %s287
      %p296 = scmp.eq.s32.totalorder %s33, 1
      %p297 = por %p295, %p296
      %p298 = scmp.ne.s32.totalorder %s287, %s288
      %p299 = scmp.eq.s32.totalorder %s33, 0
      %p300 = por %p298, %p299
      %p301 = scmp.ne.s32.totalorder %s287, %s288
      %p302 = scmp.eq.s32.totalorder %s34, 1
      %p303 = por %p301, %p302
      %p305 = scmp.ne.s32.totalorder %s288, %s304
      %p306 = scmp.eq.s32.totalorder %s34, 0
      %p307 = por %p305, %p306
      %p308 = scmp.le.s32.totalorder 1, %s28
      %p309 = scmp.lt.s32.totalorder %s28, 3
      %p310 = pnand %p308, %p309
      %p311 = pneg %p310
      // Predicated region
      $region9: #{tpu_custom_call.1} parent=5 // pred_check
        _
      $region10: #{tpu_custom_call.1} parent=5 // pred_check_branch
        %313 = sbr.rel (%p310) target = $region12
      $region11: #{tpu_custom_call.1} parent=5 // pred_region
        %s314 = ssub.s32 %s28, 1
        // Predicated region
        $region13: #{tpu_custom_call.1} parent=11 // pred_check
          %p315 = pneg %p127
        $region14: #{tpu_custom_call.1} parent=11 // pred_check_branch
          %317 = sbr.rel (%p315) target = $region16
        $region15: #{tpu_custom_call.1} parent=11 // pred_region
          %s319 = ssub.s32 3072, 3072
          %320 = vsyncadd [#allocation9], %s319
          %s321 = sshll.u32 [#allocation8], 4
          %s322 = int_to_ptr.vmem [resolvable:$true] %s321
          %327 = dma.hbm_to_vmem [thread:$0]  %s3, 3072, %s322, [#allocation9], 64, 64, 4
        $region16: #{tpu_custom_call.1} parent=11 // pred_fallthru
          _
        // Predicated region
        $region17: #{tpu_custom_call.1} parent=11 // pred_check
          %p328 = pneg %p148
        $region18: #{tpu_custom_call.1} parent=11 // pred_check_branch
          %330 = sbr.rel (%p328) target = $region20
        $region19: #{tpu_custom_call.1} parent=11 // pred_region
          _
        $region20: #{tpu_custom_call.1} parent=11 // pred_fallthru
          _
        // Predicated region
        $region21: #{tpu_custom_call.1} parent=11 // pred_check
          %p331 = pneg %p169
        $region22: #{tpu_custom_call.1} parent=11 // pred_check_branch
          %333 = sbr.rel (%p331) target = $region24
        $region23: #{tpu_custom_call.1} parent=11 // pred_region
          %s335 = ssub.s32 1024, 1024
          %336 = vsyncadd [#allocation9], %s335
          %s337 = sshll.u32 [#allocation10], 4
          %s338 = int_to_ptr.vmem [resolvable:$true] %s337
          %343 = dma.hbm_to_vmem [thread:$0]  %s5, 1024, %s338, [#allocation9], 64, 64, 4
        $region24: #{tpu_custom_call.1} parent=11 // pred_fallthru
          _
        // Predicated region
        $region25: #{tpu_custom_call.1} parent=11 // pred_check
          %p344 = pneg %p190
        $region26: #{tpu_custom_call.1} parent=11 // pred_check_branch
          %346 = sbr.rel (%p344) target = $region28
        $region27: #{tpu_custom_call.1} parent=11 // pred_region
          _
        $region28: #{tpu_custom_call.1} parent=11 // pred_fallthru
          _
        // Predicated region
        $region29: #{tpu_custom_call.1} parent=11 // pred_check
          %p347 = pneg %p211
        $region30: #{tpu_custom_call.1} parent=11 // pred_check_branch
          %349 = sbr.rel (%p347) target = $region32
        $region31: #{tpu_custom_call.1} parent=11 // pred_region
          %s351 = ssub.s32 1024, 1024
          %352 = vsyncadd [#allocation12], %s351
          %s353 = sshll.u32 [#allocation11], 4
          %s354 = int_to_ptr.vmem [resolvable:$true] %s353
          %359 = dma.hbm_to_vmem [thread:$0]  %s7, 1024, %s354, [#allocation12], 64, 64, 4
        $region32: #{tpu_custom_call.1} parent=11 // pred_fallthru
          _
        // Predicated region
        $region33: #{tpu_custom_call.1} parent=11 // pred_check
          %p360 = pneg %p232
        $region34: #{tpu_custom_call.1} parent=11 // pred_check_branch
          %362 = sbr.rel (%p360) target = $region36
        $region35: #{tpu_custom_call.1} parent=11 // pred_region
          _
        $region36: #{tpu_custom_call.1} parent=11 // pred_fallthru
          _
        // Predicated region
        $region37: #{tpu_custom_call.1} parent=11 // pred_check
          %p363 = pneg %p253
        $region38: #{tpu_custom_call.1} parent=11 // pred_check_branch
          %365 = sbr.rel (%p363) target = $region40
        $region39: #{tpu_custom_call.1} parent=11 // pred_region
          _
        $region40: #{tpu_custom_call.1} parent=11 // pred_fallthru
          _
        // Predicated region
        $region41: #{tpu_custom_call.1} parent=11 // pred_check
          %p366 = pneg %p274
        $region42: #{tpu_custom_call.1} parent=11 // pred_check_branch
          %368 = sbr.rel (%p366) target = $region44
        $region43: #{tpu_custom_call.1} parent=11 // pred_region
          _
        $region44: #{tpu_custom_call.1} parent=11 // pred_fallthru
          _
      $region12: #{tpu_custom_call.1} parent=5 // pred_fallthru
        _
      %p369 = scmp.lt.s32.totalorder %s28, 2
      // Predicated region
      $region45: #{tpu_custom_call.1} parent=5 // pred_check
        %p370 = pneg %p369
      $region46: #{tpu_custom_call.1} parent=5 // pred_check_branch
        %372 = sbr.rel (%p370) target = $region48
      $region47: #{tpu_custom_call.1} parent=5 // pred_region
        // Predicated region
        $region49: #{tpu_custom_call.1} parent=47 // pred_check
          %p373 = pneg %p48
        $region50: #{tpu_custom_call.1} parent=47 // pred_check_branch
          %375 = sbr.rel (%p373) target = $region52
        $region51: #{tpu_custom_call.1} parent=47 // pred_region
          %s376 = sand.u32 %s38, 1
          %s377 = scalar_lea.sflag [#allocation3], %s376
          %s378 = sand.u32 %s38, 1
          %s379 = smul.addr %s378, 152
          %s380 = scalar_lea.vmem [#allocation2], %s379
          %s381 = smul.u32 19, %s28
          %s383 = ssub.s32 2432, 2432
          %384 = vsyncadd %s377, %s383
          %s385 = smul.addr %s381, 128
          %s386 = scalar_lea.hbm %s0, %s385
          %s387 = sshll.u32 %s380, 4
          %s388 = int_to_ptr.vmem [resolvable:$true] %s387
          %393 = dma.hbm_to_vmem [thread:$0]  %s386, 2432, %s388, %s377, 128, 128, 8
        $region52: #{tpu_custom_call.1} parent=47 // pred_fallthru
          _
        // Predicated region
        $region53: #{tpu_custom_call.1} parent=47 // pred_check
          %p394 = pneg %p74
        $region54: #{tpu_custom_call.1} parent=47 // pred_check_branch
          %396 = sbr.rel (%p394) target = $region56
        $region55: #{tpu_custom_call.1} parent=47 // pred_region
          %s397 = sand.u32 %s28, 1
          %s398 = scalar_lea.sflag [#allocation6], %s397
          %s399 = sand.u32 %s64, 1
          %s400 = smul.addr %s399, 152
          %s401 = scalar_lea.vmem [#allocation5], %s400
          %s402 = smul.u32 19, %s28
          %s404 = ssub.s32 2432, 2432
          %405 = vsyncadd %s398, %s404
          %s406 = smul.addr %s402, 128
          %s407 = scalar_lea.hbm %s1, %s406
          %s408 = sshll.u32 %s401, 4
          %s409 = int_to_ptr.vmem [resolvable:$true] %s408
          %414 = dma.hbm_to_vmem [thread:$0]  %s407, 2432, %s409, %s398, 128, 128, 8
        $region56: #{tpu_custom_call.1} parent=47 // pred_fallthru
          _
        // Predicated region
        $region57: #{tpu_custom_call.1} parent=47 // pred_check
          %p415 = pneg %p100
        $region58: #{tpu_custom_call.1} parent=47 // pred_check_branch
          %417 = sbr.rel (%p415) target = $region60
        $region59: #{tpu_custom_call.1} parent=47 // pred_region
          %s418 = sand.u32 %s28, 1
          %s419 = scalar_lea.sflag [#allocation6], %s418
          %s420 = sand.u32 %s90, 1
          %s421 = smul.addr %s420, 152
          %s422 = scalar_lea.vmem [#allocation7], %s421
          %s423 = smul.u32 19, %s28
          %s425 = ssub.s32 2432, 2432
          %426 = vsyncadd %s419, %s425
          %s427 = smul.addr %s423, 128
          %s428 = scalar_lea.hbm %s2, %s427
          %s429 = sshll.u32 %s422, 4
          %s430 = int_to_ptr.vmem [resolvable:$true] %s429
          %435 = dma.hbm_to_vmem [thread:$0]  %s428, 2432, %s430, %s419, 128, 128, 8
        $region60: #{tpu_custom_call.1} parent=47 // pred_fallthru
          _
      $region48: #{tpu_custom_call.1} parent=5 // pred_fallthru
        _
      %p436 = scmp.le.s32.totalorder 1, %s28
      %p437 = scmp.lt.s32.totalorder %s28, 3
      %p438 = pnand %p436, %p437
      %p439 = pneg %p438
      // Predicated region
      $region61: #{tpu_custom_call.1} parent=5 // pred_check
        _
      $region62: #{tpu_custom_call.1} parent=5 // pred_check_branch
        %441 = sbr.rel (%p438) target = $region64
      $region63: #{tpu_custom_call.1} parent=5 // pred_region
        %s442 = ssub.s32 %s28, 1
        %s443 = sand.u32 %s41, 1
        %s444 = scalar_lea.sflag [#allocation3], %s443
        %s445 = sand.u32 %s41, 1
        %s446 = smul.addr %s445, 152
        %s447 = scalar_lea.vmem [#allocation2], %s446
        // Predicated region
        $region65: #{tpu_custom_call.1} parent=63 // pred_check
          %p448 = pneg %p54
        $region66: #{tpu_custom_call.1} parent=63 // pred_check_branch
          %450 = sbr.rel (%p448) target = $region68
        $region67: #{tpu_custom_call.1} parent=63 // pred_region
          %451 = dma.done %s444, 2432
        $region68: #{tpu_custom_call.1} parent=63 // pred_fallthru
          _
        %s452 = sand.u32 %s33, 1
        %s453 = scalar_lea.sflag [#allocation6], %s452
        %s454 = sand.u32 %s67, 1
        %s455 = smul.addr %s454, 152
        %s456 = scalar_lea.vmem [#allocation5], %s455
        // Predicated region
        $region69: #{tpu_custom_call.1} parent=63 // pred_check
          %p457 = pneg %p80
        $region70: #{tpu_custom_call.1} parent=63 // pred_check_branch
          %459 = sbr.rel (%p457) target = $region72
        $region71: #{tpu_custom_call.1} parent=63 // pred_region
          %460 = dma.done %s453, 2432
        $region72: #{tpu_custom_call.1} parent=63 // pred_fallthru
          _
        %s461 = sand.u32 %s33, 1
        %s462 = scalar_lea.sflag [#allocation6], %s461
        %s463 = sand.u32 %s93, 1
        %s464 = smul.addr %s463, 152
        %s465 = scalar_lea.vmem [#allocation7], %s464
        // Predicated region
        $region73: #{tpu_custom_call.1} parent=63 // pred_check
          %p466 = pneg %p106
        $region74: #{tpu_custom_call.1} parent=63 // pred_check_branch
          %468 = sbr.rel (%p466) target = $region76
        $region75: #{tpu_custom_call.1} parent=63 // pred_region
          %469 = dma.done %s462, 2432
        $region76: #{tpu_custom_call.1} parent=63 // pred_fallthru
          _
        // Predicated region
        $region77: #{tpu_custom_call.1} parent=63 // pred_check
          %p470 = pneg %p127
        $region78: #{tpu_custom_call.1} parent=63 // pred_check_branch
          %472 = sbr.rel (%p470) target = $region80
        $region79: #{tpu_custom_call.1} parent=63 // pred_region
          %473 = dma.done [#allocation9], 3072
        $region80: #{tpu_custom_call.1} parent=63 // pred_fallthru
          _
        // Predicated region
        $region81: #{tpu_custom_call.1} parent=63 // pred_check
          %p474 = pneg %p169
        $region82: #{tpu_custom_call.1} parent=63 // pred_check_branch
          %476 = sbr.rel (%p474) target = $region84
        $region83: #{tpu_custom_call.1} parent=63 // pred_region
          %477 = dma.done [#allocation9], 1024
        $region84: #{tpu_custom_call.1} parent=63 // pred_fallthru
          _
        // Predicated region
        $region85: #{tpu_custom_call.1} parent=63 // pred_check
          %p478 = pneg %p211
        $region86: #{tpu_custom_call.1} parent=63 // pred_check_branch
          %480 = sbr.rel (%p478) target = $region88
        $region87: #{tpu_custom_call.1} parent=63 // pred_region
          %481 = dma.done [#allocation12], 1024
        $region88: #{tpu_custom_call.1} parent=63 // pred_fallthru
          _
        %s482 = sand.u32 %s41, 1
        %s483 = scalar_lea.sflag [#allocation3], %s482
        %s484 = sand.u32 %s41, 1
        %s485 = smul.addr %s484, 152
        %s486 = scalar_lea.vmem [#allocation2], %s485
        %p487 = pneg %p54
        %p488 = pneg %p51
        %s489 = sand.u32 %s33, 1
        %s490 = scalar_lea.sflag [#allocation6], %s489
        %s491 = sand.u32 %s67, 1
        %s492 = smul.addr %s491, 152
        %s493 = scalar_lea.vmem [#allocation5], %s492
        %p494 = pneg %p80
        %p495 = pneg %p77
        %s496 = sand.u32 %s33, 1
        %s497 = scalar_lea.sflag [#allocation6], %s496
        %s498 = sand.u32 %s93, 1
        %s499 = smul.addr %s498, 152
        %s500 = scalar_lea.vmem [#allocation7], %s499
        %p501 = pneg %p106
        %p502 = pneg %p103
        %p503 = pneg %p127
        %p504 = pneg %p124
        %p505 = pneg %p148
        %p506 = pneg %p145
        %p507 = pneg %p169
        %p508 = pneg %p166
        %p509 = pneg %p190
        %p510 = pneg %p187
        %p511 = pneg %p211
        %p512 = pneg %p208
        %p513 = pneg %p232
        %p514 = pneg %p229
        %p515 = pneg %p253
        %p516 = pneg %p250
        %p517 = pneg %p274
        %p518 = pneg %p271
        %p519 = pneg %p300
        %p520 = pneg %p297
        %s521 = sand.u32 %s287, 1
        %s522 = scalar_lea.sflag [#allocation4], %s521
        %s523 = sand.u32 %s287, 1
        %s524 = smul.addr %s523, 152
        %s525 = scalar_lea.vmem [#allocation13], %s524
        %s526 = smul.u32 19, %s33
        %s527 = smul.u32 19, %s33
        %s528 = smul.u32 19, %s33
        %s529 = smul.u32 19, %s33
        %v531 = vld [vmem:[%s447] sm:$0xff]
        %v532 = vld [vmem:[%s447 + $0x8] sm:$0xff]
        %v533 = vld [vmem:[%s447 + $0x10] sm:$0xff]
        %v534 = vld [vmem:[%s447 + $0x18] sm:$0xff]
        %v535 = vld [vmem:[%s447 + $0x20] sm:$0xff]
        %v536 = vld [vmem:[%s447 + $0x28] sm:$0xff]
        %v537 = vld [vmem:[%s447 + $0x30] sm:$0xff]
        %v538 = vld [vmem:[%s447 + $0x38] sm:$0xff]
        %v539 = vld [vmem:[%s447 + $0x40] sm:$0xff]
        %v540 = vld [vmem:[%s447 + $0x48] sm:$0xff]
        %v541 = vld [vmem:[%s447 + $0x50] sm:$0xff]
        %v542 = vld [vmem:[%s447 + $0x58] sm:$0xff]
        %v543 = vld [vmem:[%s447 + $0x60] sm:$0xff]
        %v544 = vld [vmem:[%s447 + $0x68] sm:$0xff]
        %v545 = vld [vmem:[%s447 + $0x70] sm:$0xff]
        %v546 = vld [vmem:[%s447 + $0x78] sm:$0xff]
        %v547 = vld [vmem:[%s447 + $0x80] sm:$0xff]
        %v548 = vld [vmem:[%s447 + $0x88] sm:$0xff]
        %v549 = vld [vmem:[%s447 + $0x90] sm:$0xff]
        %v550 = vpack.c.bf16 %v532, %v531
        %v551 = vpack.c.bf16 %v534, %v533
        %v552 = vpack.c.bf16 %v536, %v535
        %v553 = vpack.c.bf16 %v538, %v537
        %v554 = vpack.c.bf16 %v540, %v539
        %v555 = vpack.c.bf16 %v542, %v541
        %v556 = vpack.c.bf16 %v544, %v543
        %v557 = vpack.c.bf16 %v546, %v545
        %v558 = vpack.c.bf16 %v548, %v547
        %v559 = vpack.c.bf16 %v549, %v549
        %v560 = vld [vmem:[%s456] sm:$0xff]
        %v561 = vld [vmem:[%s456 + $0x8] sm:$0xff]
        %v562 = vld [vmem:[%s456 + $0x10] sm:$0xff]
        %v563 = vld [vmem:[%s456 + $0x18] sm:$0xff]
        %v564 = vld [vmem:[%s456 + $0x20] sm:$0xff]
        %v565 = vld [vmem:[%s456 + $0x28] sm:$0xff]
        %v566 = vld [vmem:[%s456 + $0x30] sm:$0xff]
        %v567 = vld [vmem:[%s456 + $0x38] sm:$0xff]
        %v568 = vld [vmem:[%s456 + $0x40] sm:$0xff]
        %v569 = vld [vmem:[%s456 + $0x48] sm:$0xff]
        %v570 = vld [vmem:[%s456 + $0x50] sm:$0xff]
        %v571 = vld [vmem:[%s456 + $0x58] sm:$0xff]
        %v572 = vld [vmem:[%s456 + $0x60] sm:$0xff]
        %v573 = vld [vmem:[%s456 + $0x68] sm:$0xff]
        %v574 = vld [vmem:[%s456 + $0x70] sm:$0xff]
        %v575 = vld [vmem:[%s456 + $0x78] sm:$0xff]
        %v576 = vld [vmem:[%s456 + $0x80] sm:$0xff]
        %v577 = vld [vmem:[%s456 + $0x88] sm:$0xff]
        %v578 = vld [vmem:[%s456 + $0x90] sm:$0xff]
        %v579 = vpack.c.bf16 %v561, %v560
        %v580 = vpack.c.bf16 %v563, %v562
        %v581 = vpack.c.bf16 %v565, %v564
        %v582 = vpack.c.bf16 %v567, %v566
        %v583 = vpack.c.bf16 %v569, %v568
        %v584 = vpack.c.bf16 %v571, %v570
        %v585 = vpack.c.bf16 %v573, %v572
        %v586 = vpack.c.bf16 %v575, %v574
        %v587 = vpack.c.bf16 %v577, %v576
        %v588 = vpack.c.bf16 %v578, %v578
        %v589 = vld [vmem:[%s465] sm:$0xff]
        %v590 = vld [vmem:[%s465 + $0x8] sm:$0xff]
        %v591 = vld [vmem:[%s465 + $0x10] sm:$0xff]
        %v592 = vld [vmem:[%s465 + $0x18] sm:$0xff]
        %v593 = vld [vmem:[%s465 + $0x20] sm:$0xff]
        %v594 = vld [vmem:[%s465 + $0x28] sm:$0xff]
        %v595 = vld [vmem:[%s465 + $0x30] sm:$0xff]
        %v596 = vld [vmem:[%s465 + $0x38] sm:$0xff]
        %v597 = vld [vmem:[%s465 + $0x40] sm:$0xff]
        %v598 = vld [vmem:[%s465 + $0x48] sm:$0xff]
        %v599 = vld [vmem:[%s465 + $0x50] sm:$0xff]
        %v600 = vld [vmem:[%s465 + $0x58] sm:$0xff]
        %v601 = vld [vmem:[%s465 + $0x60] sm:$0xff]
        %v602 = vld [vmem:[%s465 + $0x68] sm:$0xff]
        %v603 = vld [vmem:[%s465 + $0x70] sm:$0xff]
        %v604 = vld [vmem:[%s465 + $0x78] sm:$0xff]
        %v605 = vld [vmem:[%s465 + $0x80] sm:$0xff]
        %v606 = vld [vmem:[%s465 + $0x88] sm:$0xff]
        %v607 = vld [vmem:[%s465 + $0x90] sm:$0xff]
        %v608 = vpack.c.bf16 %v590, %v589
        %v609 = vpack.c.bf16 %v592, %v591
        %v610 = vpack.c.bf16 %v594, %v593
        %v611 = vpack.c.bf16 %v596, %v595
        %v612 = vpack.c.bf16 %v598, %v597
        %v613 = vpack.c.bf16 %v600, %v599
        %v614 = vpack.c.bf16 %v602, %v601
        %v615 = vpack.c.bf16 %v604, %v603
        %v616 = vpack.c.bf16 %v606, %v605
        %v617 = vpack.c.bf16 %v607, %v607
        %v618 = vld [vmem:[#allocation8] sm:$0xf]
        %v619 = vld [vmem:[#allocation8 + $0x4] sm:$0xf]
        %v620 = vld [vmem:[#allocation8 + $0x8] sm:$0xf]
        %v621 = vld [vmem:[#allocation8 + $0xc] sm:$0xf]
        %v622 = vld [vmem:[#allocation8 + $0x10] sm:$0xf]
        %v623 = vld [vmem:[#allocation8 + $0x14] sm:$0xf]
        %v624 = vld [vmem:[#allocation8 + $0x18] sm:$0xf]
        %v625 = vld [vmem:[#allocation8 + $0x1c] sm:$0xf]
        %v626 = vld [vmem:[#allocation8 + $0x20] sm:$0xf]
        %v627 = vld [vmem:[#allocation8 + $0x24] sm:$0xf]
        %v628 = vld [vmem:[#allocation8 + $0x28] sm:$0xf]
        %v629 = vld [vmem:[#allocation8 + $0x2c] sm:$0xf]
        %v630 = vld [vmem:[#allocation8 + $0x30] sm:$0xf]
        %v631 = vld [vmem:[#allocation8 + $0x34] sm:$0xf]
        %v632 = vld [vmem:[#allocation8 + $0x38] sm:$0xf]
        %v633 = vld [vmem:[#allocation8 + $0x3c] sm:$0xf]
        %v634 = vld [vmem:[#allocation8 + $0x40] sm:$0xf]
        %v635 = vld [vmem:[#allocation8 + $0x44] sm:$0xf]
        %v636 = vld [vmem:[#allocation8 + $0x48] sm:$0xf]
        %v637 = vld [vmem:[#allocation8 + $0x4c] sm:$0xf]
        %v638 = vld [vmem:[#allocation8 + $0x50] sm:$0xf]
        %v639 = vld [vmem:[#allocation8 + $0x54] sm:$0xf]
        %v640 = vld [vmem:[#allocation8 + $0x58] sm:$0xf]
        %v641 = vld [vmem:[#allocation8 + $0x5c] sm:$0xf]
        %v642 = vld [vmem:[#allocation8 + $0x60] sm:$0xf]
        %v643 = vld [vmem:[#allocation8 + $0x64] sm:$0xf]
        %v644 = vld [vmem:[#allocation8 + $0x68] sm:$0xf]
        %v645 = vld [vmem:[#allocation8 + $0x6c] sm:$0xf]
        %v646 = vld [vmem:[#allocation8 + $0x70] sm:$0xf]
        %v647 = vld [vmem:[#allocation8 + $0x74] sm:$0xf]
        %v648 = vld [vmem:[#allocation8 + $0x78] sm:$0xf]
        %v649 = vld [vmem:[#allocation8 + $0x7c] sm:$0xf]
        %v650 = vld [vmem:[#allocation8 + $0x80] sm:$0xf]
        %v651 = vld [vmem:[#allocation8 + $0x84] sm:$0xf]
        %v652 = vld [vmem:[#allocation8 + $0x88] sm:$0xf]
        %v653 = vld [vmem:[#allocation8 + $0x8c] sm:$0xf]
        %v654 = vld [vmem:[#allocation8 + $0x90] sm:$0xf]
        %v655 = vld [vmem:[#allocation8 + $0x94] sm:$0xf]
        %v656 = vld [vmem:[#allocation8 + $0x98] sm:$0xf]
        %v657 = vld [vmem:[#allocation8 + $0x9c] sm:$0xf]
        %v658 = vld [vmem:[#allocation8 + $0xa0] sm:$0xf]
        %v659 = vld [vmem:[#allocation8 + $0xa4] sm:$0xf]
        %v660 = vld [vmem:[#allocation8 + $0xa8] sm:$0xf]
        %v661 = vld [vmem:[#allocation8 + $0xac] sm:$0xf]
        %v662 = vld [vmem:[#allocation8 + $0xb0] sm:$0xf]
        %v663 = vld [vmem:[#allocation8 + $0xb4] sm:$0xf]
        %v664 = vld [vmem:[#allocation8 + $0xb8] sm:$0xf]
        %v665 = vld [vmem:[#allocation8 + $0xbc] sm:$0xf]
        %v666 = vld [vmem:[%s4] sm:$0x1]
        %v668 = vlaneseq
        %v669 = vshrl.u32 %v668, 7
        %v670 = vsub.s32 0, %v669
        %v671 = vrot.slane %v666, %v670
        %v721 = vunpack.c.l.b16 %v618
        %v722 = vunpack.c.l.b16 %v619
        %v723 = vunpack.c.l.b16 %v620
        %v724 = vunpack.c.l.b16 %v621
        %v725 = vunpack.c.l.b16 %v622
        %v726 = vunpack.c.l.b16 %v623
        %v727 = vunpack.c.l.b16 %v624
        %v728 = vunpack.c.l.b16 %v625
        %v729 = vunpack.c.l.b16 %v626
        %v730 = vunpack.c.l.b16 %v627
        %v731 = vunpack.c.l.b16 %v628
        %v732 = vunpack.c.l.b16 %v629
        %v733 = vunpack.c.l.b16 %v630
        %v734 = vunpack.c.l.b16 %v631
        %v735 = vunpack.c.l.b16 %v632
        %v736 = vunpack.c.l.b16 %v633
        %v737 = vunpack.c.l.b16 %v634
        %v738 = vunpack.c.l.b16 %v635
        %v739 = vunpack.c.l.b16 %v636
        %v740 = vunpack.c.l.b16 %v637
        %v741 = vunpack.c.l.b16 %v638
        %v742 = vunpack.c.l.b16 %v639
        %v743 = vunpack.c.l.b16 %v640
        %v744 = vunpack.c.l.b16 %v641
        %v745 = vunpack.c.l.b16 %v642
        %v746 = vunpack.c.l.b16 %v643
        %v747 = vunpack.c.l.b16 %v644
        %v748 = vunpack.c.l.b16 %v645
        %v749 = vunpack.c.l.b16 %v646
        %v750 = vunpack.c.l.b16 %v647
        %v751 = vunpack.c.l.b16 %v648
        %v752 = vunpack.c.l.b16 %v649
        %v753 = vunpack.c.l.b16 %v650
        %v754 = vunpack.c.l.b16 %v651
        %v755 = vunpack.c.l.b16 %v652
        %v756 = vunpack.c.l.b16 %v653
        %v757 = vunpack.c.l.b16 %v654
        %v758 = vunpack.c.l.b16 %v655
        %v759 = vunpack.c.l.b16 %v656
        %v760 = vunpack.c.l.b16 %v657
        %v761 = vunpack.c.l.b16 %v658
        %v762 = vunpack.c.l.b16 %v659
        %v763 = vunpack.c.l.b16 %v660
        %v764 = vunpack.c.l.b16 %v661
        %v765 = vunpack.c.l.b16 %v662
        %v766 = vunpack.c.l.b16 %v663
        %v767 = vunpack.c.l.b16 %v664
        %v768 = vunpack.c.l.b16 %v665
        %v769 = vpack.c.b16 %v722, %v721
        %v770 = vpack.c.b16 %v724, %v723
        %v771 = vpack.c.b16 %v726, %v725
        %v772 = vpack.c.b16 %v728, %v727
        %v773 = vpack.c.b16 %v730, %v729
        %v774 = vpack.c.b16 %v732, %v731
        %v775 = vpack.c.b16 %v734, %v733
        %v776 = vpack.c.b16 %v736, %v735
        %v777 = vpack.c.b16 %v738, %v737
        %v778 = vpack.c.b16 %v740, %v739
        %v779 = vpack.c.b16 %v742, %v741
        %v780 = vpack.c.b16 %v744, %v743
        %v781 = vpack.c.b16 %v746, %v745
        %v782 = vpack.c.b16 %v748, %v747
        %v783 = vpack.c.b16 %v750, %v749
        %v784 = vpack.c.b16 %v752, %v751
        %v785 = vpack.c.b16 %v754, %v753
        %v786 = vpack.c.b16 %v756, %v755
        %v787 = vpack.c.b16 %v758, %v757
        %v788 = vpack.c.b16 %v760, %v759
        %v789 = vpack.c.b16 %v762, %v761
        %v790 = vpack.c.b16 %v764, %v763
        %v791 = vpack.c.b16 %v766, %v765
        %v792 = vpack.c.b16 %v768, %v767
        %817 = vmatprep.subr.bf16.mxu0 0
        %818 = vmatpush1.bf16.msra.mxu0 %v776
        %819 = vmatprep.subr.bf16.mxu0 0
        %820 = vmatpush1.bf16.msra.mxu0 %v775
        %821 = vmatprep.subr.bf16.mxu0 0
        %822 = vmatpush1.bf16.msra.mxu0 %v774
        %823 = vmatprep.subr.bf16.mxu0 0
        %824 = vmatpush1.bf16.msra.mxu0 %v773
        %825 = vmatprep.subr.bf16.mxu0 0
        %826 = vmatpush1.bf16.msra.mxu0 %v772
        %827 = vmatprep.subr.bf16.mxu0 0
        %828 = vmatpush1.bf16.msra.mxu0 %v771
        %829 = vmatprep.subr.bf16.mxu0 0
        %830 = vmatpush1.bf16.msra.mxu0 %v770
        %831 = vmatprep.subr.bf16.mxu0 0
        %832 = vmatpush1.bf16.msra.mxu0 %v769
        %833 = vmatprep.subr.bf16.mxu0 0
        %834 = vmatpush2.bf16.msra.mxu0 %v784
        %835 = vmatprep.subr.bf16.mxu0 0
        %836 = vmatpush2.bf16.msra.mxu0 %v783
        %837 = vmatprep.subr.bf16.mxu0 0
        %838 = vmatpush2.bf16.msra.mxu0 %v782
        %839 = vmatprep.subr.bf16.mxu0 0
        %840 = vmatpush2.bf16.msra.mxu0 %v781
        %841 = vmatprep.subr.bf16.mxu0 0
        %842 = vmatpush2.bf16.msra.mxu0 %v780
        %843 = vmatprep.subr.bf16.mxu0 0
        %844 = vmatpush2.bf16.msra.mxu0 %v779
        %845 = vmatprep.subr.bf16.mxu0 0
        %846 = vmatpush2.bf16.msra.mxu0 %v778
        %847 = vmatprep.subr.bf16.mxu0 0
        %848 = vmatpush2.bf16.msra.mxu0 %v777
        %849 = vmatprep.mubr.bf16.mxu0 %v579
        %850 = vmatmul.mubr.bf16.gmra.mxu0 %v550
        %v851 = vpop.f32.mrf.mxu0
        %v852 = vadd.f32 %v671, %v851
        %v853 = vpop.f32.mrf.mxu0
        %v854 = vpop.f32.mrf.mxu0
        %v855 = vadd.f32 %v671, %v854
        %v856 = vpop.f32.mrf.mxu0
        %857 = vmatprep.mubr.bf16.mxu0 %v580
        %858 = vmatmul.mubr.bf16.gmra.mxu0 %v551
        %v859 = vpop.f32.mrf.mxu0
        %v860 = vadd.f32 %v671, %v859
        %v861 = vpop.f32.mrf.mxu0
        %v862 = vpop.f32.mrf.mxu0
        %v863 = vadd.f32 %v671, %v862
        %v864 = vpop.f32.mrf.mxu0
        %865 = vmatprep.mubr.bf16.mxu0 %v581
        %866 = vmatmul.mubr.bf16.gmra.mxu0 %v552
        %v867 = vpop.f32.mrf.mxu0
        %v868 = vadd.f32 %v671, %v867
        %v869 = vpop.f32.mrf.mxu0
        %v870 = vpop.f32.mrf.mxu0
        %v871 = vadd.f32 %v671, %v870
        %v872 = vpop.f32.mrf.mxu0
        %873 = vmatprep.mubr.bf16.mxu0 %v582
        %874 = vmatmul.mubr.bf16.gmra.mxu0 %v553
        %v875 = vpop.f32.mrf.mxu0
        %v876 = vadd.f32 %v671, %v875
        %v877 = vpop.f32.mrf.mxu0
        %v878 = vpop.f32.mrf.mxu0
        %v879 = vadd.f32 %v671, %v878
        %v880 = vpop.f32.mrf.mxu0
        %881 = vmatprep.mubr.bf16.mxu0 %v583
        %882 = vmatmul.mubr.bf16.gmra.mxu0 %v554
        %v883 = vpop.f32.mrf.mxu0
        %v884 = vadd.f32 %v671, %v883
        %v885 = vpop.f32.mrf.mxu0
        %v886 = vpop.f32.mrf.mxu0
        %v887 = vadd.f32 %v671, %v886
        %v888 = vpop.f32.mrf.mxu0
        %889 = vmatprep.mubr.bf16.mxu0 %v584
        %890 = vmatmul.mubr.bf16.gmra.mxu0 %v555
        %v891 = vpop.f32.mrf.mxu0
        %v892 = vadd.f32 %v671, %v891
        %v893 = vpop.f32.mrf.mxu0
        %v894 = vpop.f32.mrf.mxu0
        %v895 = vadd.f32 %v671, %v894
        %v896 = vpop.f32.mrf.mxu0
        %897 = vmatprep.mubr.bf16.mxu0 %v585
        %898 = vmatmul.mubr.bf16.gmra.mxu0 %v556
        %v899 = vpop.f32.mrf.mxu0
        %v900 = vadd.f32 %v671, %v899
        %v901 = vpop.f32.mrf.mxu0
        %v902 = vpop.f32.mrf.mxu0
        %v903 = vadd.f32 %v671, %v902
        %v904 = vpop.f32.mrf.mxu0
        %905 = vmatprep.mubr.bf16.mxu0 %v586
        %906 = vmatmul.mubr.bf16.gmra.mxu0 %v557
        %v907 = vpop.f32.mrf.mxu0
        %v908 = vadd.f32 %v671, %v907
        %v909 = vpop.f32.mrf.mxu0
        %v910 = vpop.f32.mrf.mxu0
        %v911 = vadd.f32 %v671, %v910
        %v912 = vpop.f32.mrf.mxu0
        %913 = vmatprep.mubr.bf16.mxu0 %v587
        %914 = vmatmul.mubr.bf16.gmra.mxu0 %v558
        %v915 = vpop.f32.mrf.mxu0
        %v916 = vadd.f32 %v671, %v915
        %v917 = vpop.f32.mrf.mxu0
        %v918 = vpop.f32.mrf.mxu0
        %v919 = vadd.f32 %v671, %v918
        %v920 = vpop.f32.mrf.mxu0
        %921 = vmatprep.mubr.bf16.mxu0 %v588
        %922 = vmatmul.mubr.bf16.gmra.mxu0 %v559
        %v923 = vpop.f32.mrf.mxu0
        %v924 = vadd.f32 %v671, %v923
        %v925 = vpop.f32.mrf.mxu0
        %v926 = vpop.f32.mrf.mxu0
        %v927 = vpop.f32.mrf.mxu0
        %928 = vdwg.mxu0
        %929 = vmatprep.subr.bf16.mxu0 0
        %930 = vmatpush1.bf16.msra.mxu0 %v792
        %931 = vmatprep.subr.bf16.mxu0 0
        %932 = vmatpush1.bf16.msra.mxu0 %v791
        %933 = vmatprep.subr.bf16.mxu0 0
        %934 = vmatpush1.bf16.msra.mxu0 %v790
        %935 = vmatprep.subr.bf16.mxu0 0
        %936 = vmatpush1.bf16.msra.mxu0 %v789
        %937 = vmatprep.subr.bf16.mxu0 0
        %938 = vmatpush1.bf16.msra.mxu0 %v788
        %939 = vmatprep.subr.bf16.mxu0 0
        %940 = vmatpush1.bf16.msra.mxu0 %v787
        %941 = vmatprep.subr.bf16.mxu0 0
        %942 = vmatpush1.bf16.msra.mxu0 %v786
        %943 = vmatprep.subr.bf16.mxu0 0
        %944 = vmatpush1.bf16.msra.mxu0 %v785
        %945 = vmatprep.subr.bf16.mxu0 0
        %946 = vmatpush2.bf16.msra.mxu0 0
        %947 = vmatprep.subr.bf16.mxu0 0
        %948 = vmatpush2.bf16.msra.mxu0 0
        %949 = vmatprep.subr.bf16.mxu0 0
        %950 = vmatpush2.bf16.msra.mxu0 0
        %951 = vmatprep.subr.bf16.mxu0 0
        %952 = vmatpush2.bf16.msra.mxu0 0
        %953 = vmatprep.subr.bf16.mxu0 0
        %954 = vmatpush2.bf16.msra.mxu0 0
        %955 = vmatprep.subr.bf16.mxu0 0
        %956 = vmatpush2.bf16.msra.mxu0 0
        %957 = vmatprep.subr.bf16.mxu0 0
        %958 = vmatpush2.bf16.msra.mxu0 0
        %959 = vmatprep.subr.bf16.mxu0 0
        %960 = vmatpush2.bf16.msra.mxu0 0
        %961 = vmatprep.mubr.bf16.mxu0 0
        %962 = vmatmul.mubr.bf16.gmra.mxu0 %v608
        %v963 = vpop.f32.mrf.mxu0
        %v964 = vadd.f32 %v852, %v963
        %v965 = vpop.f32.mrf.mxu0
        %v966 = vpop.f32.mrf.mxu0
        %v967 = vadd.f32 %v855, %v966
        %v968 = vpop.f32.mrf.mxu0
        %969 = vmatprep.mubr.bf16.mxu0 0
        %970 = vmatmul.mubr.bf16.gmra.mxu0 %v609
        %v971 = vpop.f32.mrf.mxu0
        %v972 = vadd.f32 %v860, %v971
        %v973 = vpop.f32.mrf.mxu0
        %v974 = vpop.f32.mrf.mxu0
        %v975 = vadd.f32 %v863, %v974
        %v976 = vpop.f32.mrf.mxu0
        %977 = vmatprep.mubr.bf16.mxu0 0
        %978 = vmatmul.mubr.bf16.gmra.mxu0 %v610
        %v979 = vpop.f32.mrf.mxu0
        %v980 = vadd.f32 %v868, %v979
        %v981 = vpop.f32.mrf.mxu0
        %v982 = vpop.f32.mrf.mxu0
        %v983 = vadd.f32 %v871, %v982
        %v984 = vpop.f32.mrf.mxu0
        %985 = vmatprep.mubr.bf16.mxu0 0
        %986 = vmatmul.mubr.bf16.gmra.mxu0 %v611
        %v987 = vpop.f32.mrf.mxu0
        %v988 = vadd.f32 %v876, %v987
        %v989 = vpop.f32.mrf.mxu0
        %v990 = vpop.f32.mrf.mxu0
        %v991 = vadd.f32 %v879, %v990
        %v992 = vpop.f32.mrf.mxu0
        %993 = vmatprep.mubr.bf16.mxu0 0
        %994 = vmatmul.mubr.bf16.gmra.mxu0 %v612
        %v995 = vpop.f32.mrf.mxu0
        %v996 = vadd.f32 %v884, %v995
        %v997 = vpop.f32.mrf.mxu0
        %v998 = vpop.f32.mrf.mxu0
        %v999 = vadd.f32 %v887, %v998
        %v1000 = vpop.f32.mrf.mxu0
        %1001 = vmatprep.mubr.bf16.mxu0 0
        %1002 = vmatmul.mubr.bf16.gmra.mxu0 %v613
        %v1003 = vpop.f32.mrf.mxu0
        %v1004 = vadd.f32 %v892, %v1003
        %v1005 = vpop.f32.mrf.mxu0
        %v1006 = vpop.f32.mrf.mxu0
        %v1007 = vadd.f32 %v895, %v1006
        %v1008 = vpop.f32.mrf.mxu0
        %1009 = vmatprep.mubr.bf16.mxu0 0
        %1010 = vmatmul.mubr.bf16.gmra.mxu0 %v614
        %v1011 = vpop.f32.mrf.mxu0
        %v1012 = vadd.f32 %v900, %v1011
        %v1013 = vpop.f32.mrf.mxu0
        %v1014 = vpop.f32.mrf.mxu0
        %v1015 = vadd.f32 %v903, %v1014
        %v1016 = vpop.f32.mrf.mxu0
        %1017 = vmatprep.mubr.bf16.mxu0 0
        %1018 = vmatmul.mubr.bf16.gmra.mxu0 %v615
        %v1019 = vpop.f32.mrf.mxu0
        %v1020 = vadd.f32 %v908, %v1019
        %v1021 = vpop.f32.mrf.mxu0
        %v1022 = vpop.f32.mrf.mxu0
        %v1023 = vadd.f32 %v911, %v1022
        %v1024 = vpop.f32.mrf.mxu0
        %1025 = vmatprep.mubr.bf16.mxu0 0
        %1026 = vmatmul.mubr.bf16.gmra.mxu0 %v616
        %v1027 = vpop.f32.mrf.mxu0
        %v1028 = vadd.f32 %v916, %v1027
        %v1029 = vpop.f32.mrf.mxu0
        %v1030 = vpop.f32.mrf.mxu0
        %v1031 = vadd.f32 %v919, %v1030
        %v1032 = vpop.f32.mrf.mxu0
        %1033 = vmatprep.mubr.bf16.mxu0 0
        %1034 = vmatmul.mubr.bf16.gmra.mxu0 %v617
        %v1035 = vpop.f32.mrf.mxu0
        %v1036 = vadd.f32 %v924, %v1035
        %v1037 = vpop.f32.mrf.mxu0
        %v1038 = vpop.f32.mrf.mxu0
        %v1039 = vpop.f32.mrf.mxu0
        %1040 = vdwg.mxu0
        %v1041 = vmax.f32 %v964, 0.0
        %v1042 = vmax.f32 %v967, 0.0
        %v1043 = vmax.f32 %v972, 0.0
        %v1044 = vmax.f32 %v975, 0.0
        %v1045 = vmax.f32 %v980, 0.0
        %v1046 = vmax.f32 %v983, 0.0
        %v1047 = vmax.f32 %v988, 0.0
        %v1048 = vmax.f32 %v991, 0.0
        %v1049 = vmax.f32 %v996, 0.0
        %v1050 = vmax.f32 %v999, 0.0
        %v1051 = vmax.f32 %v1004, 0.0
        %v1052 = vmax.f32 %v1007, 0.0
        %v1053 = vmax.f32 %v1012, 0.0
        %v1054 = vmax.f32 %v1015, 0.0
        %v1055 = vmax.f32 %v1020, 0.0
        %v1056 = vmax.f32 %v1023, 0.0
        %v1057 = vmax.f32 %v1028, 0.0
        %v1058 = vmax.f32 %v1031, 0.0
        %v1059 = vmax.f32 %v1036, 0.0
        %v1060 = vpack.c.bf16 %v1042, %v1041
        %v1061 = vpack.c.bf16 %v1044, %v1043
        %v1062 = vpack.c.bf16 %v1046, %v1045
        %v1063 = vpack.c.bf16 %v1048, %v1047
        %v1064 = vpack.c.bf16 %v1050, %v1049
        %v1065 = vpack.c.bf16 %v1052, %v1051
        %v1066 = vpack.c.bf16 %v1054, %v1053
        %v1067 = vpack.c.bf16 %v1056, %v1055
        %v1068 = vpack.c.bf16 %v1058, %v1057
        %v1069 = vpack.c.bf16 %v1059, %v1059
        %v1070 = vld [vmem:[#allocation10] sm:$0xf]
        %v1071 = vld [vmem:[#allocation10 + $0x4] sm:$0xf]
        %v1072 = vld [vmem:[#allocation10 + $0x8] sm:$0xf]
        %v1073 = vld [vmem:[#allocation10 + $0xc] sm:$0xf]
        %v1074 = vld [vmem:[#allocation10 + $0x10] sm:$0xf]
        %v1075 = vld [vmem:[#allocation10 + $0x14] sm:$0xf]
        %v1076 = vld [vmem:[#allocation10 + $0x18] sm:$0xf]
        %v1077 = vld [vmem:[#allocation10 + $0x1c] sm:$0xf]
        %v1078 = vld [vmem:[#allocation10 + $0x20] sm:$0xf]
        %v1079 = vld [vmem:[#allocation10 + $0x24] sm:$0xf]
        %v1080 = vld [vmem:[#allocation10 + $0x28] sm:$0xf]
        %v1081 = vld [vmem:[#allocation10 + $0x2c] sm:$0xf]
        %v1082 = vld [vmem:[#allocation10 + $0x30] sm:$0xf]
        %v1083 = vld [vmem:[#allocation10 + $0x34] sm:$0xf]
        %v1084 = vld [vmem:[#allocation10 + $0x38] sm:$0xf]
        %v1085 = vld [vmem:[#allocation10 + $0x3c] sm:$0xf]
        %v1086 = vld [vmem:[%s6] sm:$0x1]
        %v1088 = vlaneseq
        %v1089 = vshrl.u32 %v1088, 7
        %v1090 = vsub.s32 0, %v1089
        %v1091 = vrot.slane %v1086, %v1090
        %v1109 = vunpack.c.l.b16 %v1070
        %v1110 = vunpack.c.l.b16 %v1071
        %v1111 = vunpack.c.l.b16 %v1072
        %v1112 = vunpack.c.l.b16 %v1073
        %v1113 = vunpack.c.l.b16 %v1074
        %v1114 = vunpack.c.l.b16 %v1075
        %v1115 = vunpack.c.l.b16 %v1076
        %v1116 = vunpack.c.l.b16 %v1077
        %v1117 = vunpack.c.l.b16 %v1078
        %v1118 = vunpack.c.l.b16 %v1079
        %v1119 = vunpack.c.l.b16 %v1080
        %v1120 = vunpack.c.l.b16 %v1081
        %v1121 = vunpack.c.l.b16 %v1082
        %v1122 = vunpack.c.l.b16 %v1083
        %v1123 = vunpack.c.l.b16 %v1084
        %v1124 = vunpack.c.l.b16 %v1085
        %v1125 = vpack.c.b16 %v1110, %v1109
        %v1126 = vpack.c.b16 %v1112, %v1111
        %v1127 = vpack.c.b16 %v1114, %v1113
        %v1128 = vpack.c.b16 %v1116, %v1115
        %v1129 = vpack.c.b16 %v1118, %v1117
        %v1130 = vpack.c.b16 %v1120, %v1119
        %v1131 = vpack.c.b16 %v1122, %v1121
        %v1132 = vpack.c.b16 %v1124, %v1123
        %1141 = vmatprep.subr.bf16.mxu0 0
        %1142 = vmatpush1.bf16.msra.mxu0 %v1132
        %1143 = vmatprep.subr.bf16.mxu0 0
        %1144 = vmatpush1.bf16.msra.mxu0 %v1131
        %1145 = vmatprep.subr.bf16.mxu0 0
        %1146 = vmatpush1.bf16.msra.mxu0 %v1130
        %1147 = vmatprep.subr.bf16.mxu0 0
        %1148 = vmatpush1.bf16.msra.mxu0 %v1129
        %1149 = vmatprep.subr.bf16.mxu0 0
        %1150 = vmatpush1.bf16.msra.mxu0 %v1128
        %1151 = vmatprep.subr.bf16.mxu0 0
        %1152 = vmatpush1.bf16.msra.mxu0 %v1127
        %1153 = vmatprep.subr.bf16.mxu0 0
        %1154 = vmatpush1.bf16.msra.mxu0 %v1126
        %1155 = vmatprep.subr.bf16.mxu0 0
        %1156 = vmatpush1.bf16.msra.mxu0 %v1125
        %1157 = vmatprep.subr.bf16.mxu0 0
        %1158 = vmatpush2.bf16.msra.mxu0 0
        %1159 = vmatprep.subr.bf16.mxu0 0
        %1160 = vmatpush2.bf16.msra.mxu0 0
        %1161 = vmatprep.subr.bf16.mxu0 0
        %1162 = vmatpush2.bf16.msra.mxu0 0
        %1163 = vmatprep.subr.bf16.mxu0 0
        %1164 = vmatpush2.bf16.msra.mxu0 0
        %1165 = vmatprep.subr.bf16.mxu0 0
        %1166 = vmatpush2.bf16.msra.mxu0 0
        %1167 = vmatprep.subr.bf16.mxu0 0
        %1168 = vmatpush2.bf16.msra.mxu0 0
        %1169 = vmatprep.subr.bf16.mxu0 0
        %1170 = vmatpush2.bf16.msra.mxu0 0
        %1171 = vmatprep.subr.bf16.mxu0 0
        %1172 = vmatpush2.bf16.msra.mxu0 0
        %1173 = vmatprep.mubr.bf16.mxu0 0
        %1174 = vmatmul.mubr.bf16.gmra.mxu0 %v1060
        %v1175 = vpop.f32.mrf.mxu0
        %v1176 = vadd.f32 %v1091, %v1175
        %v1177 = vpop.f32.mrf.mxu0
        %v1178 = vpop.f32.mrf.mxu0
        %v1179 = vadd.f32 %v1091, %v1178
        %v1180 = vpop.f32.mrf.mxu0
        %1181 = vmatprep.mubr.bf16.mxu0 0
        %1182 = vmatmul.mubr.bf16.gmra.mxu0 %v1061
        %v1183 = vpop.f32.mrf.mxu0
        %v1184 = vadd.f32 %v1091, %v1183
        %v1185 = vpop.f32.mrf.mxu0
        %v1186 = vpop.f32.mrf.mxu0
        %v1187 = vadd.f32 %v1091, %v1186
        %v1188 = vpop.f32.mrf.mxu0
        %1189 = vmatprep.mubr.bf16.mxu0 0
        %1190 = vmatmul.mubr.bf16.gmra.mxu0 %v1062
        %v1191 = vpop.f32.mrf.mxu0
        %v1192 = vadd.f32 %v1091, %v1191
        %v1193 = vpop.f32.mrf.mxu0
        %v1194 = vpop.f32.mrf.mxu0
        %v1195 = vadd.f32 %v1091, %v1194
        %v1196 = vpop.f32.mrf.mxu0
        %1197 = vmatprep.mubr.bf16.mxu0 0
        %1198 = vmatmul.mubr.bf16.gmra.mxu0 %v1063
        %v1199 = vpop.f32.mrf.mxu0
        %v1200 = vadd.f32 %v1091, %v1199
        %v1201 = vpop.f32.mrf.mxu0
        %v1202 = vpop.f32.mrf.mxu0
        %v1203 = vadd.f32 %v1091, %v1202
        %v1204 = vpop.f32.mrf.mxu0
        %1205 = vmatprep.mubr.bf16.mxu0 0
        %1206 = vmatmul.mubr.bf16.gmra.mxu0 %v1064
        %v1207 = vpop.f32.mrf.mxu0
        %v1208 = vadd.f32 %v1091, %v1207
        %v1209 = vpop.f32.mrf.mxu0
        %v1210 = vpop.f32.mrf.mxu0
        %v1211 = vadd.f32 %v1091, %v1210
        %v1212 = vpop.f32.mrf.mxu0
        %1213 = vmatprep.mubr.bf16.mxu0 0
        %1214 = vmatmul.mubr.bf16.gmra.mxu0 %v1065
        %v1215 = vpop.f32.mrf.mxu0
        %v1216 = vadd.f32 %v1091, %v1215
        %v1217 = vpop.f32.mrf.mxu0
        %v1218 = vpop.f32.mrf.mxu0
        %v1219 = vadd.f32 %v1091, %v1218
        %v1220 = vpop.f32.mrf.mxu0
        %1221 = vmatprep.mubr.bf16.mxu0 0
        %1222 = vmatmul.mubr.bf16.gmra.mxu0 %v1066
        %v1223 = vpop.f32.mrf.mxu0
        %v1224 = vadd.f32 %v1091, %v1223
        %v1225 = vpop.f32.mrf.mxu0
        %v1226 = vpop.f32.mrf.mxu0
        %v1227 = vadd.f32 %v1091, %v1226
        %v1228 = vpop.f32.mrf.mxu0
        %1229 = vmatprep.mubr.bf16.mxu0 0
        %1230 = vmatmul.mubr.bf16.gmra.mxu0 %v1067
        %v1231 = vpop.f32.mrf.mxu0
        %v1232 = vadd.f32 %v1091, %v1231
        %v1233 = vpop.f32.mrf.mxu0
        %v1234 = vpop.f32.mrf.mxu0
        %v1235 = vadd.f32 %v1091, %v1234
        %v1236 = vpop.f32.mrf.mxu0
        %1237 = vmatprep.mubr.bf16.mxu0 0
        %1238 = vmatmul.mubr.bf16.gmra.mxu0 %v1068
        %v1239 = vpop.f32.mrf.mxu0
        %v1240 = vadd.f32 %v1091, %v1239
        %v1241 = vpop.f32.mrf.mxu0
        %v1242 = vpop.f32.mrf.mxu0
        %v1243 = vadd.f32 %v1091, %v1242
        %v1244 = vpop.f32.mrf.mxu0
        %1245 = vmatprep.mubr.bf16.mxu0 0
        %1246 = vmatmul.mubr.bf16.gmra.mxu0 %v1069
        %v1247 = vpop.f32.mrf.mxu0
        %v1248 = vadd.f32 %v1091, %v1247
        %v1249 = vpop.f32.mrf.mxu0
        %v1250 = vpop.f32.mrf.mxu0
        %v1251 = vpop.f32.mrf.mxu0
        %1252 = vdwg.mxu0
        %v1253 = vmax.f32 %v1176, 0.0
        %v1254 = vmax.f32 %v1179, 0.0
        %v1255 = vmax.f32 %v1184, 0.0
        %v1256 = vmax.f32 %v1187, 0.0
        %v1257 = vmax.f32 %v1192, 0.0
        %v1258 = vmax.f32 %v1195, 0.0
        %v1259 = vmax.f32 %v1200, 0.0
        %v1260 = vmax.f32 %v1203, 0.0
        %v1261 = vmax.f32 %v1208, 0.0
        %v1262 = vmax.f32 %v1211, 0.0
        %v1263 = vmax.f32 %v1216, 0.0
        %v1264 = vmax.f32 %v1219, 0.0
        %v1265 = vmax.f32 %v1224, 0.0
        %v1266 = vmax.f32 %v1227, 0.0
        %v1267 = vmax.f32 %v1232, 0.0
        %v1268 = vmax.f32 %v1235, 0.0
        %v1269 = vmax.f32 %v1240, 0.0
        %v1270 = vmax.f32 %v1243, 0.0
        %v1271 = vmax.f32 %v1248, 0.0
        %v1272 = vpack.c.bf16 %v1254, %v1253
        %v1273 = vpack.c.bf16 %v1256, %v1255
        %v1274 = vpack.c.bf16 %v1258, %v1257
        %v1275 = vpack.c.bf16 %v1260, %v1259
        %v1276 = vpack.c.bf16 %v1262, %v1261
        %v1277 = vpack.c.bf16 %v1264, %v1263
        %v1278 = vpack.c.bf16 %v1266, %v1265
        %v1279 = vpack.c.bf16 %v1268, %v1267
        %v1280 = vpack.c.bf16 %v1270, %v1269
        %v1281 = vpack.c.bf16 %v1271, %v1271
        %v1282 = vld [vmem:[#allocation11] sm:$0xf]
        %v1283 = vld [vmem:[#allocation11 + $0x4] sm:$0xf]
        %v1284 = vld [vmem:[#allocation11 + $0x8] sm:$0xf]
        %v1285 = vld [vmem:[#allocation11 + $0xc] sm:$0xf]
        %v1286 = vld [vmem:[#allocation11 + $0x10] sm:$0xf]
        %v1287 = vld [vmem:[#allocation11 + $0x14] sm:$0xf]
        %v1288 = vld [vmem:[#allocation11 + $0x18] sm:$0xf]
        %v1289 = vld [vmem:[#allocation11 + $0x1c] sm:$0xf]
        %v1290 = vld [vmem:[#allocation11 + $0x20] sm:$0xf]
        %v1291 = vld [vmem:[#allocation11 + $0x24] sm:$0xf]
        %v1292 = vld [vmem:[#allocation11 + $0x28] sm:$0xf]
        %v1293 = vld [vmem:[#allocation11 + $0x2c] sm:$0xf]
        %v1294 = vld [vmem:[#allocation11 + $0x30] sm:$0xf]
        %v1295 = vld [vmem:[#allocation11 + $0x34] sm:$0xf]
        %v1296 = vld [vmem:[#allocation11 + $0x38] sm:$0xf]
        %v1297 = vld [vmem:[#allocation11 + $0x3c] sm:$0xf]
        %v1298 = vld [vmem:[%s8] sm:$0x1]
        %v1300 = vlaneseq
        %v1301 = vshrl.u32 %v1300, 7
        %v1302 = vsub.s32 0, %v1301
        %v1303 = vrot.slane %v1298, %v1302
        %v1321 = vunpack.c.l.b16 %v1282
        %v1322 = vunpack.c.l.b16 %v1283
        %v1323 = vunpack.c.l.b16 %v1284
        %v1324 = vunpack.c.l.b16 %v1285
        %v1325 = vunpack.c.l.b16 %v1286
        %v1326 = vunpack.c.l.b16 %v1287
        %v1327 = vunpack.c.l.b16 %v1288
        %v1328 = vunpack.c.l.b16 %v1289
        %v1329 = vunpack.c.l.b16 %v1290
        %v1330 = vunpack.c.l.b16 %v1291
        %v1331 = vunpack.c.l.b16 %v1292
        %v1332 = vunpack.c.l.b16 %v1293
        %v1333 = vunpack.c.l.b16 %v1294
        %v1334 = vunpack.c.l.b16 %v1295
        %v1335 = vunpack.c.l.b16 %v1296
        %v1336 = vunpack.c.l.b16 %v1297
        %v1337 = vpack.c.b16 %v1322, %v1321
        %v1338 = vpack.c.b16 %v1324, %v1323
        %v1339 = vpack.c.b16 %v1326, %v1325
        %v1340 = vpack.c.b16 %v1328, %v1327
        %v1341 = vpack.c.b16 %v1330, %v1329
        %v1342 = vpack.c.b16 %v1332, %v1331
        %v1343 = vpack.c.b16 %v1334, %v1333
        %v1344 = vpack.c.b16 %v1336, %v1335
        %1353 = vmatprep.subr.bf16.mxu0 0
        %1354 = vmatpush1.bf16.msra.mxu0 %v1344
        %1355 = vmatprep.subr.bf16.mxu0 0
        %1356 = vmatpush1.bf16.msra.mxu0 %v1343
        %1357 = vmatprep.subr.bf16.mxu0 0
        %1358 = vmatpush1.bf16.msra.mxu0 %v1342
        %1359 = vmatprep.subr.bf16.mxu0 0
        %1360 = vmatpush1.bf16.msra.mxu0 %v1341
        %1361 = vmatprep.subr.bf16.mxu0 0
        %1362 = vmatpush1.bf16.msra.mxu0 %v1340
        %1363 = vmatprep.subr.bf16.mxu0 0
        %1364 = vmatpush1.bf16.msra.mxu0 %v1339
        %1365 = vmatprep.subr.bf16.mxu0 0
        %1366 = vmatpush1.bf16.msra.mxu0 %v1338
        %1367 = vmatprep.subr.bf16.mxu0 0
        %1368 = vmatpush1.bf16.msra.mxu0 %v1337
        %1369 = vmatprep.subr.bf16.mxu0 0
        %1370 = vmatpush2.bf16.msra.mxu0 0
        %1371 = vmatprep.subr.bf16.mxu0 0
        %1372 = vmatpush2.bf16.msra.mxu0 0
        %1373 = vmatprep.subr.bf16.mxu0 0
        %1374 = vmatpush2.bf16.msra.mxu0 0
        %1375 = vmatprep.subr.bf16.mxu0 0
        %1376 = vmatpush2.bf16.msra.mxu0 0
        %1377 = vmatprep.subr.bf16.mxu0 0
        %1378 = vmatpush2.bf16.msra.mxu0 0
        %1379 = vmatprep.subr.bf16.mxu0 0
        %1380 = vmatpush2.bf16.msra.mxu0 0
        %1381 = vmatprep.subr.bf16.mxu0 0
        %1382 = vmatpush2.bf16.msra.mxu0 0
        %1383 = vmatprep.subr.bf16.mxu0 0
        %1384 = vmatpush2.bf16.msra.mxu0 0
        %1385 = vmatprep.mubr.bf16.mxu0 0
        %1386 = vmatmul.mubr.bf16.gmra.mxu0 %v1272
        %v1387 = vpop.f32.mrf.mxu0
        %v1388 = vadd.f32 %v1303, %v1387
        %v1389 = vpop.f32.mrf.mxu0
        %v1390 = vpop.f32.mrf.mxu0
        %v1391 = vadd.f32 %v1303, %v1390
        %v1392 = vpop.f32.mrf.mxu0
        %1393 = vmatprep.mubr.bf16.mxu0 0
        %1394 = vmatmul.mubr.bf16.gmra.mxu0 %v1273
        %v1395 = vpop.f32.mrf.mxu0
        %v1396 = vadd.f32 %v1303, %v1395
        %v1397 = vpop.f32.mrf.mxu0
        %v1398 = vpop.f32.mrf.mxu0
        %v1399 = vadd.f32 %v1303, %v1398
        %v1400 = vpop.f32.mrf.mxu0
        %1401 = vmatprep.mubr.bf16.mxu0 0
        %1402 = vmatmul.mubr.bf16.gmra.mxu0 %v1274
        %v1403 = vpop.f32.mrf.mxu0
        %v1404 = vadd.f32 %v1303, %v1403
        %v1405 = vpop.f32.mrf.mxu0
        %v1406 = vpop.f32.mrf.mxu0
        %v1407 = vadd.f32 %v1303, %v1406
        %v1408 = vpop.f32.mrf.mxu0
        %1409 = vmatprep.mubr.bf16.mxu0 0
        %1410 = vmatmul.mubr.bf16.gmra.mxu0 %v1275
        %v1411 = vpop.f32.mrf.mxu0
        %v1412 = vadd.f32 %v1303, %v1411
        %v1413 = vpop.f32.mrf.mxu0
        %v1414 = vpop.f32.mrf.mxu0
        %v1415 = vadd.f32 %v1303, %v1414
        %v1416 = vpop.f32.mrf.mxu0
        %1417 = vmatprep.mubr.bf16.mxu0 0
        %1418 = vmatmul.mubr.bf16.gmra.mxu0 %v1276
        %v1419 = vpop.f32.mrf.mxu0
        %v1420 = vadd.f32 %v1303, %v1419
        %v1421 = vpop.f32.mrf.mxu0
        %v1422 = vpop.f32.mrf.mxu0
        %v1423 = vadd.f32 %v1303, %v1422
        %v1424 = vpop.f32.mrf.mxu0
        %1425 = vmatprep.mubr.bf16.mxu0 0
        %1426 = vmatmul.mubr.bf16.gmra.mxu0 %v1277
        %v1427 = vpop.f32.mrf.mxu0
        %v1428 = vadd.f32 %v1303, %v1427
        %v1429 = vpop.f32.mrf.mxu0
        %v1430 = vpop.f32.mrf.mxu0
        %v1431 = vadd.f32 %v1303, %v1430
        %v1432 = vpop.f32.mrf.mxu0
        %1433 = vmatprep.mubr.bf16.mxu0 0
        %1434 = vmatmul.mubr.bf16.gmra.mxu0 %v1278
        %v1435 = vpop.f32.mrf.mxu0
        %v1436 = vadd.f32 %v1303, %v1435
        %v1437 = vpop.f32.mrf.mxu0
        %v1438 = vpop.f32.mrf.mxu0
        %v1439 = vadd.f32 %v1303, %v1438
        %v1440 = vpop.f32.mrf.mxu0
        %1441 = vmatprep.mubr.bf16.mxu0 0
        %1442 = vmatmul.mubr.bf16.gmra.mxu0 %v1279
        %v1443 = vpop.f32.mrf.mxu0
        %v1444 = vadd.f32 %v1303, %v1443
        %v1445 = vpop.f32.mrf.mxu0
        %v1446 = vpop.f32.mrf.mxu0
        %v1447 = vadd.f32 %v1303, %v1446
        %v1448 = vpop.f32.mrf.mxu0
        %1449 = vmatprep.mubr.bf16.mxu0 0
        %1450 = vmatmul.mubr.bf16.gmra.mxu0 %v1280
        %v1451 = vpop.f32.mrf.mxu0
        %v1452 = vadd.f32 %v1303, %v1451
        %v1453 = vpop.f32.mrf.mxu0
        %v1454 = vpop.f32.mrf.mxu0
        %v1455 = vadd.f32 %v1303, %v1454
        %v1456 = vpop.f32.mrf.mxu0
        %1457 = vmatprep.mubr.bf16.mxu0 0
        %1458 = vmatmul.mubr.bf16.gmra.mxu0 %v1281
        %v1459 = vpop.f32.mrf.mxu0
        %v1460 = vadd.f32 %v1303, %v1459
        %v1461 = vpop.f32.mrf.mxu0
        %v1462 = vpop.f32.mrf.mxu0
        %v1463 = vpop.f32.mrf.mxu0
        %1464 = vdwg.mxu0
        %1465 = vadd.xlane.f32.xlu0 %v1388
        %v1466 = vpop.xlane.xlu0 %1465
        %1467 = vadd.xlane.f32.xlu0 %v1391
        %v1468 = vpop.xlane.xlu0 %1467
        %1469 = vadd.xlane.f32.xlu0 %v1396
        %v1470 = vpop.xlane.xlu0 %1469
        %1471 = vadd.xlane.f32.xlu0 %v1399
        %v1472 = vpop.xlane.xlu0 %1471
        %1473 = vadd.xlane.f32.xlu0 %v1404
        %v1474 = vpop.xlane.xlu0 %1473
        %1475 = vadd.xlane.f32.xlu0 %v1407
        %v1476 = vpop.xlane.xlu0 %1475
        %1477 = vadd.xlane.f32.xlu0 %v1412
        %v1478 = vpop.xlane.xlu0 %1477
        %1479 = vadd.xlane.f32.xlu0 %v1415
        %v1480 = vpop.xlane.xlu0 %1479
        %1481 = vadd.xlane.f32.xlu0 %v1420
        %v1482 = vpop.xlane.xlu0 %1481
        %1483 = vadd.xlane.f32.xlu0 %v1423
        %v1484 = vpop.xlane.xlu0 %1483
        %1485 = vadd.xlane.f32.xlu0 %v1428
        %v1486 = vpop.xlane.xlu0 %1485
        %1487 = vadd.xlane.f32.xlu0 %v1431
        %v1488 = vpop.xlane.xlu0 %1487
        %1489 = vadd.xlane.f32.xlu0 %v1436
        %v1490 = vpop.xlane.xlu0 %1489
        %1491 = vadd.xlane.f32.xlu0 %v1439
        %v1492 = vpop.xlane.xlu0 %1491
        %1493 = vadd.xlane.f32.xlu0 %v1444
        %v1494 = vpop.xlane.xlu0 %1493
        %1495 = vadd.xlane.f32.xlu0 %v1447
        %v1496 = vpop.xlane.xlu0 %1495
        %1497 = vadd.xlane.f32.xlu0 %v1452
        %v1498 = vpop.xlane.xlu0 %1497
        %1499 = vadd.xlane.f32.xlu0 %v1455
        %v1500 = vpop.xlane.xlu0 %1499
        %1501 = vadd.xlane.f32.xlu0 %v1460
        %v1502 = vpop.xlane.xlu0 %1501
        %v1503 = vrcp.pop 128.0
        %v1504 = vmul.f32 %v1466, %v1503
        %v1505 = vmul.f32 %v1468, %v1503
        %v1506 = vmul.f32 %v1470, %v1503
        %v1507 = vmul.f32 %v1472, %v1503
        %v1508 = vmul.f32 %v1474, %v1503
        %v1509 = vmul.f32 %v1476, %v1503
        %v1510 = vmul.f32 %v1478, %v1503
        %v1511 = vmul.f32 %v1480, %v1503
        %v1512 = vmul.f32 %v1482, %v1503
        %v1513 = vmul.f32 %v1484, %v1503
        %v1514 = vmul.f32 %v1486, %v1503
        %v1515 = vmul.f32 %v1488, %v1503
        %v1516 = vmul.f32 %v1490, %v1503
        %v1517 = vmul.f32 %v1492, %v1503
        %v1518 = vmul.f32 %v1494, %v1503
        %v1519 = vmul.f32 %v1496, %v1503
        %v1520 = vmul.f32 %v1498, %v1503
        %v1521 = vmul.f32 %v1500, %v1503
        %v1522 = vmul.f32 %v1502, %v1503
        %v1523 = vsub.f32 %v1388, %v1504
        %v1524 = vsub.f32 %v1391, %v1505
        %v1525 = vsub.f32 %v1396, %v1506
        %v1526 = vsub.f32 %v1399, %v1507
        %v1527 = vsub.f32 %v1404, %v1508
        %v1528 = vsub.f32 %v1407, %v1509
        %v1529 = vsub.f32 %v1412, %v1510
        %v1530 = vsub.f32 %v1415, %v1511
        %v1531 = vsub.f32 %v1420, %v1512
        %v1532 = vsub.f32 %v1423, %v1513
        %v1533 = vsub.f32 %v1428, %v1514
        %v1534 = vsub.f32 %v1431, %v1515
        %v1535 = vsub.f32 %v1436, %v1516
        %v1536 = vsub.f32 %v1439, %v1517
        %v1537 = vsub.f32 %v1444, %v1518
        %v1538 = vsub.f32 %v1447, %v1519
        %v1539 = vsub.f32 %v1452, %v1520
        %v1540 = vsub.f32 %v1455, %v1521
        %v1541 = vsub.f32 %v1460, %v1522
        %v1542 = vmul.f32 %v1523, %v1523
        %v1543 = vmul.f32 %v1524, %v1524
        %v1544 = vmul.f32 %v1525, %v1525
        %v1545 = vmul.f32 %v1526, %v1526
        %v1546 = vmul.f32 %v1527, %v1527
        %v1547 = vmul.f32 %v1528, %v1528
        %v1548 = vmul.f32 %v1529, %v1529
        %v1549 = vmul.f32 %v1530, %v1530
        %v1550 = vmul.f32 %v1531, %v1531
        %v1551 = vmul.f32 %v1532, %v1532
        %v1552 = vmul.f32 %v1533, %v1533
        %v1553 = vmul.f32 %v1534, %v1534
        %v1554 = vmul.f32 %v1535, %v1535
        %v1555 = vmul.f32 %v1536, %v1536
        %v1556 = vmul.f32 %v1537, %v1537
        %v1557 = vmul.f32 %v1538, %v1538
        %v1558 = vmul.f32 %v1539, %v1539
        %v1559 = vmul.f32 %v1540, %v1540
        %v1560 = vmul.f32 %v1541, %v1541
        %1561 = vadd.xlane.f32.xlu0 %v1542
        %v1562 = vpop.xlane.xlu0 %1561
        %1563 = vadd.xlane.f32.xlu0 %v1543
        %v1564 = vpop.xlane.xlu0 %1563
        %1565 = vadd.xlane.f32.xlu0 %v1544
        %v1566 = vpop.xlane.xlu0 %1565
        %1567 = vadd.xlane.f32.xlu0 %v1545
        %v1568 = vpop.xlane.xlu0 %1567
        %1569 = vadd.xlane.f32.xlu0 %v1546
        %v1570 = vpop.xlane.xlu0 %1569
        %1571 = vadd.xlane.f32.xlu0 %v1547
        %v1572 = vpop.xlane.xlu0 %1571
        %1573 = vadd.xlane.f32.xlu0 %v1548
        %v1574 = vpop.xlane.xlu0 %1573
        %1575 = vadd.xlane.f32.xlu0 %v1549
        %v1576 = vpop.xlane.xlu0 %1575
        %1577 = vadd.xlane.f32.xlu0 %v1550
        %v1578 = vpop.xlane.xlu0 %1577
        %1579 = vadd.xlane.f32.xlu0 %v1551
        %v1580 = vpop.xlane.xlu0 %1579
        %1581 = vadd.xlane.f32.xlu0 %v1552
        %v1582 = vpop.xlane.xlu0 %1581
        %1583 = vadd.xlane.f32.xlu0 %v1553
        %v1584 = vpop.xlane.xlu0 %1583
        %1585 = vadd.xlane.f32.xlu0 %v1554
        %v1586 = vpop.xlane.xlu0 %1585
        %1587 = vadd.xlane.f32.xlu0 %v1555
        %v1588 = vpop.xlane.xlu0 %1587
        %1589 = vadd.xlane.f32.xlu0 %v1556
        %v1590 = vpop.xlane.xlu0 %1589
        %1591 = vadd.xlane.f32.xlu0 %v1557
        %v1592 = vpop.xlane.xlu0 %1591
        %1593 = vadd.xlane.f32.xlu0 %v1558
        %v1594 = vpop.xlane.xlu0 %1593
        %1595 = vadd.xlane.f32.xlu0 %v1559
        %v1596 = vpop.xlane.xlu0 %1595
        %1597 = vadd.xlane.f32.xlu0 %v1560
        %v1598 = vpop.xlane.xlu0 %1597
        %v1599 = vmul.f32 %v1562, %v1503
        %v1600 = vmul.f32 %v1564, %v1503
        %v1601 = vmul.f32 %v1566, %v1503
        %v1602 = vmul.f32 %v1568, %v1503
        %v1603 = vmul.f32 %v1570, %v1503
        %v1604 = vmul.f32 %v1572, %v1503
        %v1605 = vmul.f32 %v1574, %v1503
        %v1606 = vmul.f32 %v1576, %v1503
        %v1607 = vmul.f32 %v1578, %v1503
        %v1608 = vmul.f32 %v1580, %v1503
        %v1609 = vmul.f32 %v1582, %v1503
        %v1610 = vmul.f32 %v1584, %v1503
        %v1611 = vmul.f32 %v1586, %v1503
        %v1612 = vmul.f32 %v1588, %v1503
        %v1613 = vmul.f32 %v1590, %v1503
        %v1614 = vmul.f32 %v1592, %v1503
        %v1615 = vmul.f32 %v1594, %v1503
        %v1616 = vmul.f32 %v1596, %v1503
        %v1617 = vmul.f32 %v1598, %v1503
        %v1618 = vadd.f32 %v1599, 1e-05
        %v1619 = vadd.f32 %v1600, 1e-05
        %v1620 = vadd.f32 %v1601, 1e-05
        %v1621 = vadd.f32 %v1602, 1e-05
        %v1622 = vadd.f32 %v1603, 1e-05
        %v1623 = vadd.f32 %v1604, 1e-05
        %v1624 = vadd.f32 %v1605, 1e-05
        %v1625 = vadd.f32 %v1606, 1e-05
        %v1626 = vadd.f32 %v1607, 1e-05
        %v1627 = vadd.f32 %v1608, 1e-05
        %v1628 = vadd.f32 %v1609, 1e-05
        %v1629 = vadd.f32 %v1610, 1e-05
        %v1630 = vadd.f32 %v1611, 1e-05
        %v1631 = vadd.f32 %v1612, 1e-05
        %v1632 = vadd.f32 %v1613, 1e-05
        %v1633 = vadd.f32 %v1614, 1e-05
        %v1634 = vadd.f32 %v1615, 1e-05
        %v1635 = vadd.f32 %v1616, 1e-05
        %v1636 = vadd.f32 %v1617, 1e-05
        %v1637 = vrsqrt.pop %v1618
        %v1638 = vrsqrt.pop %v1619
        %v1639 = vrsqrt.pop %v1620
        %v1640 = vrsqrt.pop %v1621
        %v1641 = vrsqrt.pop %v1622
        %v1642 = vrsqrt.pop %v1623
        %v1643 = vrsqrt.pop %v1624
        %v1644 = vrsqrt.pop %v1625
        %v1645 = vrsqrt.pop %v1626
        %v1646 = vrsqrt.pop %v1627
        %v1647 = vrsqrt.pop %v1628
        %v1648 = vrsqrt.pop %v1629
        %v1649 = vrsqrt.pop %v1630
        %v1650 = vrsqrt.pop %v1631
        %v1651 = vrsqrt.pop %v1632
        %v1652 = vrsqrt.pop %v1633
        %v1653 = vrsqrt.pop %v1634
        %v1654 = vrsqrt.pop %v1635
        %v1655 = vrsqrt.pop %v1636
        %v1656 = vmul.f32 %v1523, %v1637
        %v1657 = vmul.f32 %v1524, %v1638
        %v1658 = vmul.f32 %v1525, %v1639
        %v1659 = vmul.f32 %v1526, %v1640
        %v1660 = vmul.f32 %v1527, %v1641
        %v1661 = vmul.f32 %v1528, %v1642
        %v1662 = vmul.f32 %v1529, %v1643
        %v1663 = vmul.f32 %v1530, %v1644
        %v1664 = vmul.f32 %v1531, %v1645
        %v1665 = vmul.f32 %v1532, %v1646
        %v1666 = vmul.f32 %v1533, %v1647
        %v1667 = vmul.f32 %v1534, %v1648
        %v1668 = vmul.f32 %v1535, %v1649
        %v1669 = vmul.f32 %v1536, %v1650
        %v1670 = vmul.f32 %v1537, %v1651
        %v1671 = vmul.f32 %v1538, %v1652
        %v1672 = vmul.f32 %v1539, %v1653
        %v1673 = vmul.f32 %v1540, %v1654
        %v1674 = vmul.f32 %v1541, %v1655
        %v1675 = vld [vmem:[%s9] sm:$0x1]
        %v1677 = vlaneseq
        %v1678 = vshrl.u32 %v1677, 7
        %v1679 = vsub.s32 0, %v1678
        %v1680 = vrot.slane %v1675, %v1679
        %v1682 = vmul.f32 %v1656, %v1680
        %v1683 = vmul.f32 %v1657, %v1680
        %v1684 = vmul.f32 %v1658, %v1680
        %v1685 = vmul.f32 %v1659, %v1680
        %v1686 = vmul.f32 %v1660, %v1680
        %v1687 = vmul.f32 %v1661, %v1680
        %v1688 = vmul.f32 %v1662, %v1680
        %v1689 = vmul.f32 %v1663, %v1680
        %v1690 = vmul.f32 %v1664, %v1680
        %v1691 = vmul.f32 %v1665, %v1680
        %v1692 = vmul.f32 %v1666, %v1680
        %v1693 = vmul.f32 %v1667, %v1680
        %v1694 = vmul.f32 %v1668, %v1680
        %v1695 = vmul.f32 %v1669, %v1680
        %v1696 = vmul.f32 %v1670, %v1680
        %v1697 = vmul.f32 %v1671, %v1680
        %v1698 = vmul.f32 %v1672, %v1680
        %v1699 = vmul.f32 %v1673, %v1680
        %v1700 = vmul.f32 %v1674, %v1680
        %v1701 = vld [vmem:[%s10] sm:$0x1]
        %v1703 = vlaneseq
        %v1704 = vshrl.u32 %v1703, 7
        %v1705 = vsub.s32 0, %v1704
        %v1706 = vrot.slane %v1701, %v1705
        %v1708 = vadd.f32 %v1682, %v1706
        %v1709 = vadd.f32 %v1683, %v1706
        %v1710 = vadd.f32 %v1684, %v1706
        %v1711 = vadd.f32 %v1685, %v1706
        %v1712 = vadd.f32 %v1686, %v1706
        %v1713 = vadd.f32 %v1687, %v1706
        %v1714 = vadd.f32 %v1688, %v1706
        %v1715 = vadd.f32 %v1689, %v1706
        %v1716 = vadd.f32 %v1690, %v1706
        %v1717 = vadd.f32 %v1691, %v1706
        %v1718 = vadd.f32 %v1692, %v1706
        %v1719 = vadd.f32 %v1693, %v1706
        %v1720 = vadd.f32 %v1694, %v1706
        %v1721 = vadd.f32 %v1695, %v1706
        %v1722 = vadd.f32 %v1696, %v1706
        %v1723 = vadd.f32 %v1697, %v1706
        %v1724 = vadd.f32 %v1698, %v1706
        %v1725 = vadd.f32 %v1699, %v1706
        %v1726 = vadd.f32 %v1700, %v1706
        %1727 = vst [vmem:[%s525] sm:$0xff] %v1708
        %1728 = vst [vmem:[%s525 + $0x8] sm:$0xff] %v1709
        %1729 = vst [vmem:[%s525 + $0x10] sm:$0xff] %v1710
        %1730 = vst [vmem:[%s525 + $0x18] sm:$0xff] %v1711
        %1731 = vst [vmem:[%s525 + $0x20] sm:$0xff] %v1712
        %1732 = vst [vmem:[%s525 + $0x28] sm:$0xff] %v1713
        %1733 = vst [vmem:[%s525 + $0x30] sm:$0xff] %v1714
        %1734 = vst [vmem:[%s525 + $0x38] sm:$0xff] %v1715
        %1735 = vst [vmem:[%s525 + $0x40] sm:$0xff] %v1716
        %1736 = vst [vmem:[%s525 + $0x48] sm:$0xff] %v1717
        %1737 = vst [vmem:[%s525 + $0x50] sm:$0xff] %v1718
        %1738 = vst [vmem:[%s525 + $0x58] sm:$0xff] %v1719
        %1739 = vst [vmem:[%s525 + $0x60] sm:$0xff] %v1720
        %1740 = vst [vmem:[%s525 + $0x68] sm:$0xff] %v1721
        %1741 = vst [vmem:[%s525 + $0x70] sm:$0xff] %v1722
        %1742 = vst [vmem:[%s525 + $0x78] sm:$0xff] %v1723
        %1743 = vst [vmem:[%s525 + $0x80] sm:$0xff] %v1724
        %1744 = vst [vmem:[%s525 + $0x88] sm:$0xff] %v1725
        %1745 = vst [vmem:[%s525 + $0x90] sm:$0xff] %v1726
        %s1746 = sand.u32 %s287, 1
        %s1747 = scalar_lea.sflag [#allocation4], %s1746
        %s1748 = sand.u32 %s287, 1
        %s1749 = smul.addr %s1748, 152
        %s1750 = scalar_lea.vmem [#allocation13], %s1749
        // Predicated region
        $region89: #{tpu_custom_call.1} parent=63 // pred_check
          %p1751 = pneg %p297
        $region90: #{tpu_custom_call.1} parent=63 // pred_check_branch
          %1753 = sbr.rel (%p1751) target = $region92
        $region91: #{tpu_custom_call.1} parent=63 // pred_region
          %s1754 = smul.u32 19, %s33
          %s1756 = ssub.s32 2432, 2432
          %1757 = vsyncadd %s1747, %s1756
          %s1758 = smul.addr %s1754, 128
          %s1759 = scalar_lea.hbm %s11, %s1758
          %s1760 = sshll.u32 %s1750, 4
          %s1761 = int_to_ptr.vmem [resolvable:$true] %s1760
          %1766 = dma.vmem_to_hbm [thread:$0]  %s1761, 2432, %s1759, %s1747, 128, 128, 8
        $region92: #{tpu_custom_call.1} parent=63 // pred_fallthru
          _
      $region64: #{tpu_custom_call.1} parent=5 // pred_fallthru
        _
      %p1767 = scmp.le.s32.totalorder 2, %s28
      // Predicated region
      $region93: #{tpu_custom_call.1} parent=5 // pred_check
        %p1768 = pneg %p1767
      $region94: #{tpu_custom_call.1} parent=5 // pred_check_branch
        %1770 = sbr.rel (%p1768) target = $region96
      $region95: #{tpu_custom_call.1} parent=5 // pred_region
        %s1771 = ssub.s32 %s28, 2
        // Predicated region
        $region97: #{tpu_custom_call.1} parent=95 // pred_check
          %p1772 = pneg %p303
        $region98: #{tpu_custom_call.1} parent=95 // pred_check_branch
          %1774 = sbr.rel (%p1772) target = $region100
        $region99: #{tpu_custom_call.1} parent=95 // pred_region
          %s1775 = sand.u32 %s288, 1
          %s1776 = scalar_lea.sflag [#allocation4], %s1775
          %s1777 = sand.u32 %s288, 1
          %s1778 = smul.addr %s1777, 152
          %s1779 = scalar_lea.vmem [#allocation13], %s1778
          %1780 = dma.done %s1776, 2432
        $region100: #{tpu_custom_call.1} parent=95 // pred_fallthru
          _
      $region96: #{tpu_custom_call.1} parent=5 // pred_fallthru
        _
    $region6: #{tpu_custom_call.1} parent=1 // loop_footer
      %s32 = sadd.s32 1, %s28
    $region7: #{tpu_custom_call.1} parent=1 // loop_footer_branch
      %27 = sbr.rel target = $region3
    $region8: #{tpu_custom_call.1} parent=1 // loop_exit
      _
    %1781 = vsyncpa [#allocation3], 1
    %s1782 = scalar_lea.sflag [#allocation3], 1
    %1783 = vsyncpa %s1782, 1
    %1784 = vsyncpa [#allocation6], 1
    %s1785 = scalar_lea.sflag [#allocation6], 1
    %1786 = vsyncpa %s1785, 1
    %1787 = vsyncpa [#allocation9], 1
    %1788 = vsyncpa [#allocation12], 1
    %1789 = vsyncpa [#allocation4], 1
    %s1790 = scalar_lea.sflag [#allocation4], 1
    %1791 = vsyncpa %s1790, 1

</llo_original>
